<compile_context>
chip_gen: v6e
topology: v6e:2x2x1
jax: 0.10.0
libtpu: 0.0.40
codegen_flags: <defaults>
</compile_context>

<pallas_src>
import functools

import numpy as np

import jax
import jax.numpy as jnp
from jax import lax
from jax.experimental import pallas as pl
from jax.experimental.pallas import tpu as pltpu

GROWTH_RATE = 24
NUM_BN = 3
EPS = 1e-5


def _tap_masks(N, H, W):
    """(9, 1, N*H*W) f32 border masks for the 9 taps of a 3x3 conv, pad=1.

    mask[k, 0, p] == 1 iff tap (dy, dx) = (k//3-1, k%3-1) reads an in-image
    pixel at flattened position p (computed from p % (H*W), so it also masks
    any cross-image wrap of the lane-rolled operand when batch is folded
    into the lane axis).
    """
    HW = H * W
    pos = np.arange(N * HW) % HW
    py, px = pos // W, pos % W
    m = np.zeros((9, 1, N * HW), np.float32)
    for k in range(9):
        dy, dx = k // 3 - 1, k % 3 - 1
        ok = (py + dy >= 0) & (py + dy < H) & (px + dx >= 0) & (px + dx < W)
        m[k, 0] = ok.astype(np.float32)
    return jnp.asarray(m)


# ---------------------------------------------------------------------------
# Fused kernel: BN1 -> ReLU -> 1x1 conv -> (+BN2 bias) -> ReLU -> 3x3 conv
#               -> concat([x, out]) written as one aligned block.
# All tensors are channel-major: (C, N*H*W) with N*H*W on the lane axis.
# ---------------------------------------------------------------------------
def _bottleneck_fused_kernel(x_ref, s1_ref, b1_ref, w1_ref, b2_ref, w2_ref,
                             m_ref, o_ref, *, W):
    NHW = x_ref.shape[1]

    x = x_ref[...]                                          # (Cin, NHW) f32

    # --- BN1 (folded eval-mode affine) + ReLU, f32 on the VPU --------------
    h = jnp.maximum(x * s1_ref[...] + b1_ref[...], 0.0)     # (Cin, NHW)

    # --- 1x1 conv as a channel matmul (BN2 scale folded into w1) -----------
    # bf16 operands, f32 accumulation.  K = Cin is tiny (mostly drain
    # latency), but the MXU has slack so it stays here (review item 9).
    mid = jnp.dot(w1_ref[...], h.astype(jnp.bfloat16),
                  preferred_element_type=jnp.float32)       # (inter, NHW)
    mid = jnp.maximum(mid + b2_ref[...], 0.0)

    # --- 3x3 conv, padding=1: ONE K-stacked matmul -------------------------
    # Nine lane-rolled copies of `mid`, each multiplied by its precomputed
    # border mask (one vmul per tap), stacked along the sublane axis
    # (each 72-row f32 part is 8-aligned), cast to bf16 once, then a single
    # (growth, 9*inter) x (9*inter, NHW) MXU pass with f32 accumulation.
    parts = []
    for k in range(9):
        dy, dx = k // 3 - 1, k % 3 - 1
        s = dy * W + dx                                     # flat lane shift
        if s == 0:
            r = mid
        else:
            # r[:, p] = mid[:, (p + s) mod NHW]; out-of-image / cross-image
            # wrap lanes are exactly the ones the mask zeroes.
            r = pltpu.roll(mid, shift=(-s) % NHW, axis=1)
        parts.append(r * m_ref[k])                          # (inter, NHW) f32
    stacked = jnp.concatenate(parts, axis=0)                # (9*inter, NHW)
    acc = jnp.dot(w2_ref[...], stacked.astype(jnp.bfloat16),
                  preferred_element_type=jnp.float32)       # (growth, NHW)

    # --- dropout (eval) == identity; single aligned full-block store -------
    o_ref[...] = jnp.concatenate([x, acc], axis=0).astype(o_ref.dtype)


# ---------------------------------------------------------------------------
# Wrapper
# ---------------------------------------------------------------------------
def bottleneck_block_forward(x_nchw, params):
    """x_nchw: (N, Cin, H, W) float32.  Returns (N, Cin+growth, H, W)."""
    N, Cin, H, W = x_nchw.shape
    inter = params["w1"].shape[0]          # w1: (inter, Cin)
    growth = params["w2"].shape[0]         # w2: (growth, 9*inter), tap-major
    HW = H * W
    NHW = N * HW

    # Fold BatchNorm (eval mode) into per-channel affines; fold BN2 scale
    # into the 1x1 weight.  Weights are cast to bf16 once (MXU operands).
    s1 = params["g1"] / jnp.sqrt(params["v1"] + EPS)
    b1 = (params["b1"] - params["m1"] * s1).reshape(Cin, 1)
    s1 = s1.reshape(Cin, 1)
    s2 = params["g2"] / jnp.sqrt(params["v2"] + EPS)
    b2 = (params["b2"] - params["m2"] * s2).reshape(inter, 1)
    w1s = (params["w1"] * s2[:, None]).astype(jnp.bfloat16)       # (inter, Cin)
    w2s = params["w2"].astype(jnp.bfloat16)                       # (growth, 9*inter)

    # Precomputed multiplicative border masks (hoisted out of the kernel).
    masks = _tap_masks(N, H, W)                                   # (9, 1, NHW)

    # Channel-major with batch folded into the lane axis: (Cin, N*HW).
    x_cm = jnp.transpose(x_nchw, (1, 0, 2, 3)).reshape(Cin, NHW)

    kernel = functools.partial(_bottleneck_fused_kernel, W=W)
    out_cm = pl.pallas_call(
        kernel,
        out_shape=jax.ShapeDtypeStruct((Cin + growth, NHW), jnp.float32),
        grid_spec=pltpu.PrefetchScalarGridSpec(
            num_scalar_prefetch=0,
            grid=(1,),                                    # single step, 1 TC
            in_specs=[
                pl.BlockSpec((Cin, NHW), lambda i: (0, 0)),          # x
                pl.BlockSpec((Cin, 1), lambda i: (0, 0)),            # s1
                pl.BlockSpec((Cin, 1), lambda i: (0, 0)),            # b1
                pl.BlockSpec((inter, Cin), lambda i: (0, 0)),        # w1*s2
                pl.BlockSpec((inter, 1), lambda i: (0, 0)),          # b2
                pl.BlockSpec((growth, 9 * inter), lambda i: (0, 0)), # w2
                pl.BlockSpec((9, 1, NHW), lambda i: (0, 0, 0)),      # masks
            ],
            out_specs=pl.BlockSpec((Cin + growth, NHW), lambda i: (0, 0)),
        ),
        compiler_params=pltpu.CompilerParams(
            dimension_semantics=("arbitrary",)),
    )(x_cm, s1, b1, w1s, b2, w2s, masks)

    # (Cout, N*HW) -> NCHW.
    return jnp.transpose(out_cm.reshape(Cin + growth, N, H, W), (1, 0, 2, 3))


# ---------------------------------------------------------------------------
# Pure-JAX reference (for a correctness check)
# ---------------------------------------------------------------------------
def reference_forward(x_nchw, params, w1_oihw, w2_oihw):
    def bn(x, g, b, m, v):
        g = g.reshape(1, -1, 1, 1)
        b = b.reshape(1, -1, 1, 1)
        m = m.reshape(1, -1, 1, 1)
        v = v.reshape(1, -1, 1, 1)
        return (x - m) / jnp.sqrt(v + EPS) * g + b

    h = jnp.maximum(bn(x_nchw, params["g1"], params["b1"],
                       params["m1"], params["v1"]), 0.0)
    h = lax.conv_general_dilated(h, w1_oihw, (1, 1), "VALID",
                                 dimension_numbers=("NCHW", "OIHW", "NCHW"))
    h = jnp.maximum(bn(h, params["g2"], params["b2"],
                       params["m2"], params["v2"]), 0.0)
    h = lax.conv_general_dilated(h, w2_oihw, (1, 1), [(1, 1), (1, 1)],
                                 dimension_numbers=("NCHW", "OIHW", "NCHW"))
    return jnp.concatenate([x_nchw, h], axis=1)


if __name__ == "__main__":
    key = jax.random.PRNGKey(0)
    N, Cin, H, W = 2, 4, 16, 16
    inter = NUM_BN * GROWTH_RATE     # 72
    growth = GROWTH_RATE             # 24

    keys = jax.random.split(key, 11)
    x = jax.random.normal(keys[0], (N, Cin, H, W), jnp.float32)

    # Deterministic synthetic parameters (no checkpoint).
    g1 = jax.random.normal(keys[1], (Cin,), jnp.float32) * 0.1 + 1.0
    b1 = jax.random.normal(keys[2], (Cin,), jnp.float32) * 0.1
    m1 = jax.random.normal(keys[3], (Cin,), jnp.float32) * 0.1
    v1 = jax.random.uniform(keys[4], (Cin,), jnp.float32, 0.5, 1.5)
    g2 = jax.random.normal(keys[5], (inter,), jnp.float32) * 0.1 + 1.0
    b2 = jax.random.normal(keys[6], (inter,), jnp.float32) * 0.1
    m2 = jax.random.normal(keys[7], (inter,), jnp.float32) * 0.1
    v2 = jax.random.uniform(keys[8], (inter,), jnp.float32, 0.5, 1.5)

    w1_oihw = jax.random.normal(keys[9], (inter, Cin, 1, 1), jnp.float32) * 0.1
    w2_oihw = jax.random.normal(keys[10], (growth, inter, 3, 3), jnp.float32) * 0.05

    # Kernel-side weight layouts (channel-major):
    #   w1: (inter, Cin)            -- OIHW squeezed
    #   w2: (growth, 9*inter)       -- K-stacked, tap-major (ky, kx) x inter
    w1_k = w1_oihw[:, :, 0, 0]
    w2_k = jnp.transpose(w2_oihw, (0, 2, 3, 1)).reshape(growth, 9 * inter)

    params = dict(g1=g1, b1=b1, m1=m1, v1=v1,
                  g2=g2, b2=b2, m2=m2, v2=v2,
                  w1=w1_k, w2=w2_k)

    out = jax.block_until_ready(bottleneck_block_forward(x, params))
    ref = jax.block_until_ready(reference_forward(x, params, w1_oihw, w2_oihw))

    assert out.shape == (N, Cin + growth, H, W), out.shape
    # Passthrough channels are exact f32 copies of x.
    assert jnp.allclose(out[:, :Cin], x, atol=1e-6, rtol=0.0)
    # New features: bf16 MXU operands with f32 accumulation -> small noise
    # vs. the f32 reference; a real bug (wrong tap/mask/fold) would blow
    # straight through these bounds.
    max_err = float(jnp.max(jnp.abs(out - ref)))
    mean_err = float(jnp.mean(jnp.abs(out[:, Cin:] - ref[:, Cin:])))
    assert jnp.allclose(out, ref, atol=3e-2, rtol=3e-2), max_err
    assert mean_err < 5e-3, mean_err

    print("KERNEL_OK")
</pallas_src>

<mosaic_0001>
module attributes {stable_mosaic.version = 11 : i64} {
  func.func @_bottleneck_fused_kernel(%arg0: i32, %arg1: memref<4x512xf32, #tpu.memory_space<vmem>>, %arg2: memref<4x1xf32, #tpu.memory_space<vmem>>, %arg3: memref<4x1xf32, #tpu.memory_space<vmem>>, %arg4: memref<72x4xbf16, #tpu.memory_space<vmem>>, %arg5: memref<72x1xf32, #tpu.memory_space<vmem>>, %arg6: memref<24x648xbf16, #tpu.memory_space<vmem>>, %arg7: memref<9x1x512xf32, #tpu.memory_space<vmem>>, %arg8: memref<28x512xf32, #tpu.memory_space<vmem>>) attributes {dimension_semantics = [#tpu.dimension_semantics<arbitrary>], iteration_bounds = array<i64: 1>, scalar_prefetch = 0 : i64, scratch_operands = 0 : i64, tpu.core_type = #tpu.core_type<tc>, window_params = [{pipeline_mode = #tpu.pipeline_mode<synchronous>, transform_indices = @transform_0, window_bounds = array<i64: 4, 512>}, {pipeline_mode = #tpu.pipeline_mode<synchronous>, transform_indices = @transform_1, window_bounds = array<i64: 4, 1>}, {pipeline_mode = #tpu.pipeline_mode<synchronous>, transform_indices = @transform_2, window_bounds = array<i64: 4, 1>}, {pipeline_mode = #tpu.pipeline_mode<synchronous>, transform_indices = @transform_3, window_bounds = array<i64: 72, 4>}, {pipeline_mode = #tpu.pipeline_mode<synchronous>, transform_indices = @transform_4, window_bounds = array<i64: 72, 1>}, {pipeline_mode = #tpu.pipeline_mode<synchronous>, transform_indices = @transform_5, window_bounds = array<i64: 24, 648>}, {pipeline_mode = #tpu.pipeline_mode<synchronous>, transform_indices = @transform_6, window_bounds = array<i64: 9, 1, 512>}, {pipeline_mode = #tpu.pipeline_mode<synchronous>, transform_indices = @transform_7, window_bounds = array<i64: 28, 512>}]} {
    %c0 = arith.constant 0 : index
    %c0_0 = arith.constant 0 : index
    %0 = vector.load %arg1[%c0, %c0_0] : memref<4x512xf32, #tpu.memory_space<vmem>>, vector<4x512xf32>
    %c0_1 = arith.constant 0 : index
    %c0_2 = arith.constant 0 : index
    %1 = vector.load %arg2[%c0_1, %c0_2] : memref<4x1xf32, #tpu.memory_space<vmem>>, vector<4x1xf32>
    %2 = vector.broadcast %1 : vector<4x1xf32> to vector<4x512xf32>
    %3 = arith.mulf %0, %2 : vector<4x512xf32>
    %c0_3 = arith.constant 0 : index
    %c0_4 = arith.constant 0 : index
    %4 = vector.load %arg3[%c0_3, %c0_4] : memref<4x1xf32, #tpu.memory_space<vmem>>, vector<4x1xf32>
    %5 = vector.broadcast %4 : vector<4x1xf32> to vector<4x512xf32>
    %6 = arith.addf %3, %5 : vector<4x512xf32>
    %cst = arith.constant 0.000000e+00 : f32
    %7 = vector.broadcast %cst : f32 to vector<4x512xf32>
    %8 = arith.maximumf %6, %7 : vector<4x512xf32>
    %c0_5 = arith.constant 0 : index
    %c0_6 = arith.constant 0 : index
    %9 = vector.load %arg4[%c0_5, %c0_6] : memref<72x4xbf16, #tpu.memory_space<vmem>>, vector<72x4xbf16>
    %10 = arith.truncf %8 : vector<4x512xf32> to vector<4x512xbf16>
    %cst_7 = arith.constant dense<0.000000e+00> : vector<72x512xf32>
    %11 = tpu.matmul %9, %10, %cst_7 {dimension_numbers = #tpu.dot_dimension_numbers<[1], [0], [0], [1], [0, 0, 1, 1], [], []>} : vector<72x4xbf16>, vector<4x512xbf16>, vector<72x512xf32> -> vector<72x512xf32>
    %c0_8 = arith.constant 0 : index
    %c0_9 = arith.constant 0 : index
    %12 = vector.load %arg5[%c0_8, %c0_9] : memref<72x1xf32, #tpu.memory_space<vmem>>, vector<72x1xf32>
    %13 = vector.broadcast %12 : vector<72x1xf32> to vector<72x512xf32>
    %14 = arith.addf %11, %13 : vector<72x512xf32>
    %cst_10 = arith.constant 0.000000e+00 : f32
    %15 = vector.broadcast %cst_10 : f32 to vector<72x512xf32>
    %16 = arith.maximumf %14, %15 : vector<72x512xf32>
    %c17_i32 = arith.constant 17 : i32
    %17 = tpu.dynamic_rotate %16 by %c17_i32 dim 1 : vector<72x512xf32>, i32 -> vector<72x512xf32>
    %c0_11 = arith.constant 0 : index
    %c0_12 = arith.constant 0 : index
    %c0_13 = arith.constant 0 : index
    %18 = vector.load %arg7[%c0_11, %c0_12, %c0_13] : memref<9x1x512xf32, #tpu.memory_space<vmem>>, vector<1x1x512xf32>
    %19 = vector.shape_cast %18 : vector<1x1x512xf32> to vector<1x512xf32>
    %20 = vector.broadcast %19 : vector<1x512xf32> to vector<72x512xf32>
    %21 = arith.mulf %17, %20 : vector<72x512xf32>
    %c16_i32 = arith.constant 16 : i32
    %22 = tpu.dynamic_rotate %16 by %c16_i32 dim 1 : vector<72x512xf32>, i32 -> vector<72x512xf32>
    %c1 = arith.constant 1 : index
    %c0_14 = arith.constant 0 : index
    %c0_15 = arith.constant 0 : index
    %23 = vector.load %arg7[%c1, %c0_14, %c0_15] : memref<9x1x512xf32, #tpu.memory_space<vmem>>, vector<1x1x512xf32>
    %24 = vector.shape_cast %23 : vector<1x1x512xf32> to vector<1x512xf32>
    %25 = vector.broadcast %24 : vector<1x512xf32> to vector<72x512xf32>
    %26 = arith.mulf %22, %25 : vector<72x512xf32>
    %c15_i32 = arith.constant 15 : i32
    %27 = tpu.dynamic_rotate %16 by %c15_i32 dim 1 : vector<72x512xf32>, i32 -> vector<72x512xf32>
    %c2 = arith.constant 2 : index
    %c0_16 = arith.constant 0 : index
    %c0_17 = arith.constant 0 : index
    %28 = vector.load %arg7[%c2, %c0_16, %c0_17] : memref<9x1x512xf32, #tpu.memory_space<vmem>>, vector<1x1x512xf32>
    %29 = vector.shape_cast %28 : vector<1x1x512xf32> to vector<1x512xf32>
    %30 = vector.broadcast %29 : vector<1x512xf32> to vector<72x512xf32>
    %31 = arith.mulf %27, %30 : vector<72x512xf32>
    %c1_i32 = arith.constant 1 : i32
    %32 = tpu.dynamic_rotate %16 by %c1_i32 dim 1 : vector<72x512xf32>, i32 -> vector<72x512xf32>
    %c3 = arith.constant 3 : index
    %c0_18 = arith.constant 0 : index
    %c0_19 = arith.constant 0 : index
    %33 = vector.load %arg7[%c3, %c0_18, %c0_19] : memref<9x1x512xf32, #tpu.memory_space<vmem>>, vector<1x1x512xf32>
    %34 = vector.shape_cast %33 : vector<1x1x512xf32> to vector<1x512xf32>
    %35 = vector.broadcast %34 : vector<1x512xf32> to vector<72x512xf32>
    %36 = arith.mulf %32, %35 : vector<72x512xf32>
    %c4 = arith.constant 4 : index
    %c0_20 = arith.constant 0 : index
    %c0_21 = arith.constant 0 : index
    %37 = vector.load %arg7[%c4, %c0_20, %c0_21] : memref<9x1x512xf32, #tpu.memory_space<vmem>>, vector<1x1x512xf32>
    %38 = vector.shape_cast %37 : vector<1x1x512xf32> to vector<1x512xf32>
    %39 = vector.broadcast %38 : vector<1x512xf32> to vector<72x512xf32>
    %40 = arith.mulf %16, %39 : vector<72x512xf32>
    %c511_i32 = arith.constant 511 : i32
    %41 = tpu.dynamic_rotate %16 by %c511_i32 dim 1 : vector<72x512xf32>, i32 -> vector<72x512xf32>
    %c5 = arith.constant 5 : index
    %c0_22 = arith.constant 0 : index
    %c0_23 = arith.constant 0 : index
    %42 = vector.load %arg7[%c5, %c0_22, %c0_23] : memref<9x1x512xf32, #tpu.memory_space<vmem>>, vector<1x1x512xf32>
    %43 = vector.shape_cast %42 : vector<1x1x512xf32> to vector<1x512xf32>
    %44 = vector.broadcast %43 : vector<1x512xf32> to vector<72x512xf32>
    %45 = arith.mulf %41, %44 : vector<72x512xf32>
    %c497_i32 = arith.constant 497 : i32
    %46 = tpu.dynamic_rotate %16 by %c497_i32 dim 1 : vector<72x512xf32>, i32 -> vector<72x512xf32>
    %c6 = arith.constant 6 : index
    %c0_24 = arith.constant 0 : index
    %c0_25 = arith.constant 0 : index
    %47 = vector.load %arg7[%c6, %c0_24, %c0_25] : memref<9x1x512xf32, #tpu.memory_space<vmem>>, vector<1x1x512xf32>
    %48 = vector.shape_cast %47 : vector<1x1x512xf32> to vector<1x512xf32>
    %49 = vector.broadcast %48 : vector<1x512xf32> to vector<72x512xf32>
    %50 = arith.mulf %46, %49 : vector<72x512xf32>
    %c496_i32 = arith.constant 496 : i32
    %51 = tpu.dynamic_rotate %16 by %c496_i32 dim 1 : vector<72x512xf32>, i32 -> vector<72x512xf32>
    %c7 = arith.constant 7 : index
    %c0_26 = arith.constant 0 : index
    %c0_27 = arith.constant 0 : index
    %52 = vector.load %arg7[%c7, %c0_26, %c0_27] : memref<9x1x512xf32, #tpu.memory_space<vmem>>, vector<1x1x512xf32>
    %53 = vector.shape_cast %52 : vector<1x1x512xf32> to vector<1x512xf32>
    %54 = vector.broadcast %53 : vector<1x512xf32> to vector<72x512xf32>
    %55 = arith.mulf %51, %54 : vector<72x512xf32>
    %c495_i32 = arith.constant 495 : i32
    %56 = tpu.dynamic_rotate %16 by %c495_i32 dim 1 : vector<72x512xf32>, i32 -> vector<72x512xf32>
    %c8 = arith.constant 8 : index
    %c0_28 = arith.constant 0 : index
    %c0_29 = arith.constant 0 : index
    %57 = vector.load %arg7[%c8, %c0_28, %c0_29] : memref<9x1x512xf32, #tpu.memory_space<vmem>>, vector<1x1x512xf32>
    %58 = vector.shape_cast %57 : vector<1x1x512xf32> to vector<1x512xf32>
    %59 = vector.broadcast %58 : vector<1x512xf32> to vector<72x512xf32>
    %60 = arith.mulf %56, %59 : vector<72x512xf32>
    %61 = tpu.concatenate %21, %26, %31, %36, %40, %45, %50, %55, %60 in 0 : vector<72x512xf32>, vector<72x512xf32>, vector<72x512xf32>, vector<72x512xf32>, vector<72x512xf32>, vector<72x512xf32>, vector<72x512xf32>, vector<72x512xf32>, vector<72x512xf32> -> vector<648x512xf32>
    %c0_30 = arith.constant 0 : index
    %c0_31 = arith.constant 0 : index
    %62 = vector.load %arg6[%c0_30, %c0_31] : memref<24x648xbf16, #tpu.memory_space<vmem>>, vector<24x648xbf16>
    %63 = arith.truncf %61 : vector<648x512xf32> to vector<648x512xbf16>
    %cst_32 = arith.constant dense<0.000000e+00> : vector<24x512xf32>
    %64 = tpu.matmul %62, %63, %cst_32 {dimension_numbers = #tpu.dot_dimension_numbers<[1], [0], [0], [1], [0, 0, 1, 1], [], []>} : vector<24x648xbf16>, vector<648x512xbf16>, vector<24x512xf32> -> vector<24x512xf32>
    %65 = tpu.concatenate %0, %64 in 0 : vector<4x512xf32>, vector<24x512xf32> -> vector<28x512xf32>
    %c0_33 = arith.constant 0 : index
    %c0_34 = arith.constant 0 : index
    %66 = vector.load %arg8[%c0_33, %c0_34] : memref<28x512xf32, #tpu.memory_space<vmem>>, vector<28x512xf32>
    tpu.vector_store %arg8[%c0_33, %c0_34], %65 {strides = array<i32>} : memref<28x512xf32, #tpu.memory_space<vmem>>, vector<28x512xf32>,
    return
  }
  func.func @transform_0(%arg0: i32) -> (i32, i32) {
    %c0_i32 = arith.constant 0 : i32
    %c0_i32_0 = arith.constant 0 : i32
    %c0_i32_1 = arith.constant 0 : i32
    return %c0_i32, %c0_i32_0 : i32, i32
  }
  func.func @transform_1(%arg0: i32) -> (i32, i32) {
    %c0_i32 = arith.constant 0 : i32
    %c0_i32_0 = arith.constant 0 : i32
    %c0_i32_1 = arith.constant 0 : i32
    return %c0_i32, %c0_i32_0 : i32, i32
  }
  func.func @transform_2(%arg0: i32) -> (i32, i32) {
    %c0_i32 = arith.constant 0 : i32
    %c0_i32_0 = arith.constant 0 : i32
    %c0_i32_1 = arith.constant 0 : i32
    return %c0_i32, %c0_i32_0 : i32, i32
  }
  func.func @transform_3(%arg0: i32) -> (i32, i32) {
    %c0_i32 = arith.constant 0 : i32
    %c0_i32_0 = arith.constant 0 : i32
    %c0_i32_1 = arith.constant 0 : i32
    return %c0_i32, %c0_i32_0 : i32, i32
  }
  func.func @transform_4(%arg0: i32) -> (i32, i32) {
    %c0_i32 = arith.constant 0 : i32
    %c0_i32_0 = arith.constant 0 : i32
    %c0_i32_1 = arith.constant 0 : i32
    return %c0_i32, %c0_i32_0 : i32, i32
  }
  func.func @transform_5(%arg0: i32) -> (i32, i32) {
    %c0_i32 = arith.constant 0 : i32
    %c0_i32_0 = arith.constant 0 : i32
    %c0_i32_1 = arith.constant 0 : i32
    return %c0_i32, %c0_i32_0 : i32, i32
  }
  func.func @transform_6(%arg0: i32) -> (i32, i32, i32) {
    %c0_i32 = arith.constant 0 : i32
    %c0_i32_0 = arith.constant 0 : i32
    %c0_i32_1 = arith.constant 0 : i32
    %c0_i32_2 = arith.constant 0 : i32
    return %c0_i32, %c0_i32_0, %c0_i32_1 : i32, i32, i32
  }
  func.func @transform_7(%arg0: i32) -> (i32, i32) {
    %c0_i32 = arith.constant 0 : i32
    %c0_i32_0 = arith.constant 0 : i32
    %c0_i32_1 = arith.constant 0 : i32
    return %c0_i32, %c0_i32_0 : i32, i32
  }
}

</mosaic_0001>

<llo_original>
// kernel: tpu_custom_call.1
$region0: #{tpu_custom_call.1}
  #allocation0 [shape = 'u32[]', space=smem, size = 0x4, offset = 0x4, fixed_abs, tag = 'smem constant byte address 0x4 - core index']
  #allocation1 [shape = 'u32[144,128]{1,0:T(1,128)}', space=vmem, size = 0x12000, scoped, tag = 'internal scratch']
  %s0 = inlined_call_operand.vmem [shape: f32[4,512], index: 0, kind: input, shape index: {}]
  %s1 = inlined_call_operand.vmem [shape: f32[4,1], index: 1, kind: input, shape index: {}]
  %s2 = inlined_call_operand.vmem [shape: f32[4,1], index: 2, kind: input, shape index: {}]
  %s3 = inlined_call_operand.vmem [shape: bf16[72,4], index: 3, kind: input, shape index: {}]
  %s4 = inlined_call_operand.vmem [shape: f32[72,1], index: 4, kind: input, shape index: {}]
  %s5 = inlined_call_operand.vmem [shape: bf16[24,648], index: 5, kind: input, shape index: {}]
  %s6 = inlined_call_operand.vmem [shape: f32[9,1,512], index: 6, kind: input, shape index: {}]
  %s7 = inlined_call_operand.hbm [shape: f32[28,512], index: 7, kind: output, shape index: {}]
  %s8 = sld [smem:[#allocation0]]
  $region38: #{tpu_custom_call.1} parent=0
    _
  %s10 = ssub.s32 1, %s8
  %s11 = scalar_select 0, %s10, %s8
  $region1: #{tpu_custom_call.1} parent=0
    #allocation2 [shape = 'u8[65536]{0}', space=vmem, size = 0x10000, scoped, tag = 'output window, operand 0, single buffered']
    #allocation3 [shape = 's32[1]{0}', space=sflag, size = 0x4, scoped, tag = 'scoped memory for tpu_custom_call.1']
    %12 = vsyncpa [#allocation3], 0
    // Predicated region
    $region2: #{tpu_custom_call.1} parent=1 // pred_check
      _
    $region3: #{tpu_custom_call.1} parent=1 // pred_check_branch
      %14 = sbr.rel (0) target = $region5
    $region4: #{tpu_custom_call.1} parent=1 // pred_region
      _
    $region5: #{tpu_custom_call.1} parent=1 // pred_fallthru
      _
    // Predicated region
    $region6: #{tpu_custom_call.1} parent=1 // pred_check
      _
    $region7: #{tpu_custom_call.1} parent=1 // pred_check_branch
      %16 = sbr.rel (0) target = $region9
    $region8: #{tpu_custom_call.1} parent=1 // pred_region
      _
    $region9: #{tpu_custom_call.1} parent=1 // pred_fallthru
      _
    // Predicated region
    $region10: #{tpu_custom_call.1} parent=1 // pred_check
      _
    $region11: #{tpu_custom_call.1} parent=1 // pred_check_branch
      %18 = sbr.rel (0) target = $region13
    $region12: #{tpu_custom_call.1} parent=1 // pred_region
      _
    $region13: #{tpu_custom_call.1} parent=1 // pred_fallthru
      _
    // Predicated region
    $region14: #{tpu_custom_call.1} parent=1 // pred_check
      _
    $region15: #{tpu_custom_call.1} parent=1 // pred_check_branch
      %20 = sbr.rel (0) target = $region17
    $region16: #{tpu_custom_call.1} parent=1 // pred_region
      _
    $region17: #{tpu_custom_call.1} parent=1 // pred_fallthru
      _
    // Predicated region
    $region18: #{tpu_custom_call.1} parent=1 // pred_check
      _
    $region19: #{tpu_custom_call.1} parent=1 // pred_check_branch
      %22 = sbr.rel (0) target = $region21
    $region20: #{tpu_custom_call.1} parent=1 // pred_region
      _
    $region21: #{tpu_custom_call.1} parent=1 // pred_fallthru
      _
    // Predicated region
    $region22: #{tpu_custom_call.1} parent=1 // pred_check
      _
    $region23: #{tpu_custom_call.1} parent=1 // pred_check_branch
      %24 = sbr.rel (0) target = $region25
    $region24: #{tpu_custom_call.1} parent=1 // pred_region
      _
    $region25: #{tpu_custom_call.1} parent=1 // pred_fallthru
      _
    // Predicated region
    $region26: #{tpu_custom_call.1} parent=1 // pred_check
      _
    $region27: #{tpu_custom_call.1} parent=1 // pred_check_branch
      %26 = sbr.rel (0) target = $region29
    $region28: #{tpu_custom_call.1} parent=1 // pred_region
      _
    $region29: #{tpu_custom_call.1} parent=1 // pred_fallthru
      _
    %v28 = vld [vmem:[%s0] sm:$0xff]
    %v29 = vld [vmem:[%s0 + $0x8] sm:$0xff]
    %v30 = vld [vmem:[%s1] sm:$0xf]
    %32 = vset.pattern.permute.xlu0 0
    %33 = vperm.xlu0 %32, %v30
    %v34 = vpop.permute.xlu0 %33
    %v36 = vunpack.c.l.s4 839922192
    %v37 = vunpack.c.0.s8 %v36
    %v38 = vlaneseq
    %v39 = vshrl.u32 %v38, 7
    %v40 = vsub.s32 %v37, %v39
    %v41 = vrot.slane %v34, %v40
    %v43 = vmul.f32 %v28, %v41
    %v44 = vmul.f32 %v29, %v41
    %v45 = vld [vmem:[%s2] sm:$0xf]
    %47 = vset.pattern.permute.xlu0 0
    %48 = vperm.xlu0 %47, %v45
    %v49 = vpop.permute.xlu0 %48
    %v51 = vunpack.c.l.s4 839922192
    %v52 = vunpack.c.0.s8 %v51
    %v53 = vlaneseq
    %v54 = vshrl.u32 %v53, 7
    %v55 = vsub.s32 %v52, %v54
    %v56 = vrot.slane %v49, %v55
    %v58 = vadd.f32 %v43, %v56
    %v59 = vadd.f32 %v44, %v56
    %v60 = vmax.f32 %v58, 0.0
    %v61 = vmax.f32 %v59, 0.0
    %v62 = vld [vmem:[%s3] sm:$0xf]
    %v63 = vld [vmem:[%s3 + $0x4] sm:$0xf]
    %v64 = vld [vmem:[%s3 + $0x8] sm:$0xf]
    %v65 = vld [vmem:[%s3 + $0xc] sm:$0xf]
    %v66 = vld [vmem:[%s3 + $0x10] sm:$0xf]
    %v67 = vld [vmem:[%s3 + $0x14] sm:$0xf]
    %v68 = vld [vmem:[%s3 + $0x18] sm:$0xf]
    %v69 = vld [vmem:[%s3 + $0x1c] sm:$0xf]
    %v70 = vld [vmem:[%s3 + $0x20] sm:$0xf]
    %v73 = vcombine.high %v60, %v60
    %v74 = vcombine.high %v61, %v61
    %v77 = vpack.c.bf16 %v60, %v60
    %v78 = vpack.c.bf16 %v73, %v73
    %v79 = vpack.c.bf16 %v61, %v61
    %v80 = vpack.c.bf16 %v74, %v74
    %v81 = vld [vmem:[%s4] sm:$0xff]
    %v82 = vld [vmem:[%s4 + $0x8] sm:$0xff]
    %v83 = vld [vmem:[%s4 + $0x10] sm:$0xff]
    %v84 = vld [vmem:[%s4 + $0x18] sm:$0xff]
    %v85 = vld [vmem:[%s4 + $0x20] sm:$0xff]
    %v86 = vld [vmem:[%s4 + $0x28] sm:$0xff]
    %v87 = vld [vmem:[%s4 + $0x30] sm:$0xff]
    %v88 = vld [vmem:[%s4 + $0x38] sm:$0xff]
    %v89 = vld [vmem:[%s4 + $0x40] sm:$0xff]
    %91 = vset.pattern.permute.xlu0 0
    %92 = vperm.xlu0 %91, %v81
    %v93 = vpop.permute.xlu0 %92
    %96 = vset.pattern.permute.xlu0 0
    %97 = vperm.xlu0 %96, %v82
    %v98 = vpop.permute.xlu0 %97
    %101 = vset.pattern.permute.xlu0 0
    %102 = vperm.xlu0 %101, %v83
    %v103 = vpop.permute.xlu0 %102
    %106 = vset.pattern.permute.xlu0 0
    %107 = vperm.xlu0 %106, %v84
    %v108 = vpop.permute.xlu0 %107
    %111 = vset.pattern.permute.xlu0 0
    %112 = vperm.xlu0 %111, %v85
    %v113 = vpop.permute.xlu0 %112
    %116 = vset.pattern.permute.xlu0 0
    %117 = vperm.xlu0 %116, %v86
    %v118 = vpop.permute.xlu0 %117
    %121 = vset.pattern.permute.xlu0 0
    %122 = vperm.xlu0 %121, %v87
    %v123 = vpop.permute.xlu0 %122
    %126 = vset.pattern.permute.xlu0 0
    %127 = vperm.xlu0 %126, %v88
    %v128 = vpop.permute.xlu0 %127
    %131 = vset.pattern.permute.xlu0 0
    %132 = vperm.xlu0 %131, %v89
    %v133 = vpop.permute.xlu0 %132
    %v144 = vunpack.c.l.b16 %v62
    %v145 = vunpack.c.l.b16 %v63
    %v146 = vunpack.c.l.b16 %v64
    %v147 = vunpack.c.l.b16 %v65
    %v148 = vunpack.c.l.b16 %v66
    %v149 = vunpack.c.l.b16 %v67
    %v150 = vunpack.c.l.b16 %v68
    %v151 = vunpack.c.l.b16 %v69
    %v152 = vunpack.c.l.b16 %v70
    %v153 = vpack.c.b16 %v145, %v144
    %v154 = vpack.c.b16 %v147, %v146
    %v155 = vpack.c.b16 %v149, %v148
    %v156 = vpack.c.b16 %v151, %v150
    %v157 = vpack.c.b16 %v152, %v152
    %vm158 = vcmask 31744
    %v160 = vsel %vm158, %v153, 0
    %v163 = vsel %vm158, %v154, 0
    %v166 = vsel %vm158, %v155, 0
    %v169 = vsel %vm158, %v156, 0
    %v172 = vsel %vm158, %v157, 0
    %vm174 = vcmask 1041408
    %v176 = vsel %vm174, %v77, 0
    %v179 = vsel %vm174, %v78, 0
    %v182 = vsel %vm174, %v79, 0
    %v185 = vsel %vm174, %v80, 0
    %187 = vmatprep.subr.bf16.mxu0 0
    %188 = vmatpush1.bf16.msra.mxu0 0
    %189 = vmatprep.subr.bf16.mxu0 0
    %190 = vmatpush1.bf16.msra.mxu0 0
    %191 = vmatprep.subr.bf16.mxu0 0
    %192 = vmatpush1.bf16.msra.mxu0 0
    %193 = vmatprep.subr.bf16.mxu0 0
    %194 = vmatpush1.bf16.msra.mxu0 0
    %195 = vmatprep.subr.bf16.mxu0 0
    %196 = vmatpush1.bf16.msra.mxu0 0
    %197 = vmatprep.subr.bf16.mxu0 0
    %198 = vmatpush1.bf16.msra.mxu0 0
    %199 = vmatprep.subr.bf16.mxu0 0
    %200 = vmatpush1.bf16.msra.mxu0 0
    %201 = vmatprep.subr.bf16.mxu0 %v179
    %202 = vmatpush1.bf16.msra.mxu0 %v176
    %203 = vmatprep.subr.bf16.mxu0 0
    %204 = vmatpush2.bf16.msra.mxu0 0
    %205 = vmatprep.subr.bf16.mxu0 0
    %206 = vmatpush2.bf16.msra.mxu0 0
    %207 = vmatprep.subr.bf16.mxu0 0
    %208 = vmatpush2.bf16.msra.mxu0 0
    %209 = vmatprep.subr.bf16.mxu0 0
    %210 = vmatpush2.bf16.msra.mxu0 0
    %211 = vmatprep.subr.bf16.mxu0 0
    %212 = vmatpush2.bf16.msra.mxu0 0
    %213 = vmatprep.subr.bf16.mxu0 0
    %214 = vmatpush2.bf16.msra.mxu0 0
    %215 = vmatprep.subr.bf16.mxu0 0
    %216 = vmatpush2.bf16.msra.mxu0 0
    %217 = vmatprep.subr.bf16.mxu0 0
    %218 = vmatpush2.bf16.msra.mxu0 0
    %219 = vmatprep.mubr.bf16.mxu0 0
    %220 = vmatmul.mubr.bf16.gmra.mxu0 %v160
    %v221 = vpop.f32.mrf.mxu0
    %v222 = vadd.f32 %v93, %v221
    %v223 = vpop.f32.mrf.mxu0
    %v224 = vadd.f32 %v93, %v223
    %v225 = vpop.f32.mrf.mxu0
    %v226 = vadd.f32 %v98, %v225
    %v227 = vpop.f32.mrf.mxu0
    %v228 = vadd.f32 %v98, %v227
    %229 = vmatprep.mubr.bf16.mxu0 0
    %230 = vmatmul.mubr.bf16.gmra.mxu0 %v163
    %v231 = vpop.f32.mrf.mxu0
    %v232 = vadd.f32 %v103, %v231
    %v233 = vpop.f32.mrf.mxu0
    %v234 = vadd.f32 %v103, %v233
    %v235 = vpop.f32.mrf.mxu0
    %v236 = vadd.f32 %v108, %v235
    %v237 = vpop.f32.mrf.mxu0
    %v238 = vadd.f32 %v108, %v237
    %239 = vmatprep.mubr.bf16.mxu0 0
    %240 = vmatmul.mubr.bf16.gmra.mxu0 %v166
    %v241 = vpop.f32.mrf.mxu0
    %v242 = vadd.f32 %v113, %v241
    %v243 = vpop.f32.mrf.mxu0
    %v244 = vadd.f32 %v113, %v243
    %v245 = vpop.f32.mrf.mxu0
    %v246 = vadd.f32 %v118, %v245
    %v247 = vpop.f32.mrf.mxu0
    %v248 = vadd.f32 %v118, %v247
    %249 = vmatprep.mubr.bf16.mxu0 0
    %250 = vmatmul.mubr.bf16.gmra.mxu0 %v169
    %v251 = vpop.f32.mrf.mxu0
    %v252 = vadd.f32 %v123, %v251
    %v253 = vpop.f32.mrf.mxu0
    %v254 = vadd.f32 %v123, %v253
    %v255 = vpop.f32.mrf.mxu0
    %v256 = vadd.f32 %v128, %v255
    %v257 = vpop.f32.mrf.mxu0
    %v258 = vadd.f32 %v128, %v257
    %259 = vmatprep.mubr.bf16.mxu0 0
    %260 = vmatmul.mubr.bf16.gmra.mxu0 %v172
    %v261 = vpop.f32.mrf.mxu0
    %v262 = vadd.f32 %v133, %v261
    %v263 = vpop.f32.mrf.mxu0
    %v264 = vadd.f32 %v133, %v263
    %v265 = vpop.f32.mrf.mxu0
    %v266 = vpop.f32.mrf.mxu0
    %267 = vdwg.mxu0
    %268 = vmatprep.subr.bf16.mxu0 0
    %269 = vmatpush1.bf16.msra.mxu0 0
    %270 = vmatprep.subr.bf16.mxu0 0
    %271 = vmatpush1.bf16.msra.mxu0 0
    %272 = vmatprep.subr.bf16.mxu0 0
    %273 = vmatpush1.bf16.msra.mxu0 0
    %274 = vmatprep.subr.bf16.mxu0 0
    %275 = vmatpush1.bf16.msra.mxu0 0
    %276 = vmatprep.subr.bf16.mxu0 0
    %277 = vmatpush1.bf16.msra.mxu0 0
    %278 = vmatprep.subr.bf16.mxu0 0
    %279 = vmatpush1.bf16.msra.mxu0 0
    %280 = vmatprep.subr.bf16.mxu0 0
    %281 = vmatpush1.bf16.msra.mxu0 0
    %282 = vmatprep.subr.bf16.mxu0 %v185
    %283 = vmatpush1.bf16.msra.mxu0 %v182
    %284 = vmatprep.subr.bf16.mxu0 0
    %285 = vmatpush2.bf16.msra.mxu0 0
    %286 = vmatprep.subr.bf16.mxu0 0
    %287 = vmatpush2.bf16.msra.mxu0 0
    %288 = vmatprep.subr.bf16.mxu0 0
    %289 = vmatpush2.bf16.msra.mxu0 0
    %290 = vmatprep.subr.bf16.mxu0 0
    %291 = vmatpush2.bf16.msra.mxu0 0
    %292 = vmatprep.subr.bf16.mxu0 0
    %293 = vmatpush2.bf16.msra.mxu0 0
    %294 = vmatprep.subr.bf16.mxu0 0
    %295 = vmatpush2.bf16.msra.mxu0 0
    %296 = vmatprep.subr.bf16.mxu0 0
    %297 = vmatpush2.bf16.msra.mxu0 0
    %298 = vmatprep.subr.bf16.mxu0 0
    %299 = vmatpush2.bf16.msra.mxu0 0
    %300 = vmatprep.mubr.bf16.mxu0 0
    %301 = vmatmul.mubr.bf16.gmra.mxu0 %v160
    %v302 = vpop.f32.mrf.mxu0
    %v303 = vadd.f32 %v93, %v302
    %v304 = vpop.f32.mrf.mxu0
    %v305 = vadd.f32 %v93, %v304
    %v306 = vpop.f32.mrf.mxu0
    %v307 = vadd.f32 %v98, %v306
    %v308 = vpop.f32.mrf.mxu0
    %v309 = vadd.f32 %v98, %v308
    %310 = vmatprep.mubr.bf16.mxu0 0
    %311 = vmatmul.mubr.bf16.gmra.mxu0 %v163
    %v312 = vpop.f32.mrf.mxu0
    %v313 = vadd.f32 %v103, %v312
    %v314 = vpop.f32.mrf.mxu0
    %v315 = vadd.f32 %v103, %v314
    %v316 = vpop.f32.mrf.mxu0
    %v317 = vadd.f32 %v108, %v316
    %v318 = vpop.f32.mrf.mxu0
    %v319 = vadd.f32 %v108, %v318
    %320 = vmatprep.mubr.bf16.mxu0 0
    %321 = vmatmul.mubr.bf16.gmra.mxu0 %v166
    %v322 = vpop.f32.mrf.mxu0
    %v323 = vadd.f32 %v113, %v322
    %v324 = vpop.f32.mrf.mxu0
    %v325 = vadd.f32 %v113, %v324
    %v326 = vpop.f32.mrf.mxu0
    %v327 = vadd.f32 %v118, %v326
    %v328 = vpop.f32.mrf.mxu0
    %v329 = vadd.f32 %v118, %v328
    %330 = vmatprep.mubr.bf16.mxu0 0
    %331 = vmatmul.mubr.bf16.gmra.mxu0 %v169
    %v332 = vpop.f32.mrf.mxu0
    %v333 = vadd.f32 %v123, %v332
    %v334 = vpop.f32.mrf.mxu0
    %v335 = vadd.f32 %v123, %v334
    %v336 = vpop.f32.mrf.mxu0
    %v337 = vadd.f32 %v128, %v336
    %v338 = vpop.f32.mrf.mxu0
    %v339 = vadd.f32 %v128, %v338
    %340 = vmatprep.mubr.bf16.mxu0 0
    %341 = vmatmul.mubr.bf16.gmra.mxu0 %v172
    %v342 = vpop.f32.mrf.mxu0
    %v343 = vadd.f32 %v133, %v342
    %v344 = vpop.f32.mrf.mxu0
    %v345 = vadd.f32 %v133, %v344
    %v346 = vpop.f32.mrf.mxu0
    %v347 = vpop.f32.mrf.mxu0
    %348 = vdwg.mxu0
    %v349 = vmax.f32 %v222, 0.0
    %v350 = vmax.f32 %v224, 0.0
    %v351 = vmax.f32 %v303, 0.0
    %v352 = vmax.f32 %v305, 0.0
    %v353 = vmax.f32 %v226, 0.0
    %v354 = vmax.f32 %v228, 0.0
    %v355 = vmax.f32 %v307, 0.0
    %v356 = vmax.f32 %v309, 0.0
    %v357 = vmax.f32 %v232, 0.0
    %v358 = vmax.f32 %v234, 0.0
    %v359 = vmax.f32 %v313, 0.0
    %v360 = vmax.f32 %v315, 0.0
    %v361 = vmax.f32 %v236, 0.0
    %v362 = vmax.f32 %v238, 0.0
    %v363 = vmax.f32 %v317, 0.0
    %v364 = vmax.f32 %v319, 0.0
    %v365 = vmax.f32 %v242, 0.0
    %v366 = vmax.f32 %v244, 0.0
    %v367 = vmax.f32 %v323, 0.0
    %v368 = vmax.f32 %v325, 0.0
    %v369 = vmax.f32 %v246, 0.0
    %v370 = vmax.f32 %v248, 0.0
    %v371 = vmax.f32 %v327, 0.0
    %v372 = vmax.f32 %v329, 0.0
    %v373 = vmax.f32 %v252, 0.0
    %v374 = vmax.f32 %v254, 0.0
    %v375 = vmax.f32 %v333, 0.0
    %v376 = vmax.f32 %v335, 0.0
    %v377 = vmax.f32 %v256, 0.0
    %v378 = vmax.f32 %v258, 0.0
    %v379 = vmax.f32 %v337, 0.0
    %v380 = vmax.f32 %v339, 0.0
    %v381 = vmax.f32 %v262, 0.0
    %v382 = vmax.f32 %v264, 0.0
    %v383 = vmax.f32 %v343, 0.0
    %v384 = vmax.f32 %v345, 0.0
    %385 = vrot.lane.b32.xlu0 %v349, 17
    %v386 = vpop.permute.xlu0 %385
    %387 = vrot.lane.b32.xlu0 %v353, 17
    %v388 = vpop.permute.xlu0 %387
    %389 = vrot.lane.b32.xlu0 %v357, 17
    %v390 = vpop.permute.xlu0 %389
    %391 = vrot.lane.b32.xlu0 %v361, 17
    %v392 = vpop.permute.xlu0 %391
    %393 = vrot.lane.b32.xlu0 %v365, 17
    %v394 = vpop.permute.xlu0 %393
    %395 = vrot.lane.b32.xlu0 %v369, 17
    %v396 = vpop.permute.xlu0 %395
    %397 = vrot.lane.b32.xlu0 %v373, 17
    %v398 = vpop.permute.xlu0 %397
    %399 = vrot.lane.b32.xlu0 %v377, 17
    %v400 = vpop.permute.xlu0 %399
    %401 = vrot.lane.b32.xlu0 %v381, 17
    %v402 = vpop.permute.xlu0 %401
    %403 = vrot.lane.b32.xlu0 %v350, 17
    %v404 = vpop.permute.xlu0 %403
    %405 = vrot.lane.b32.xlu0 %v354, 17
    %v406 = vpop.permute.xlu0 %405
    %407 = vrot.lane.b32.xlu0 %v358, 17
    %v408 = vpop.permute.xlu0 %407
    %409 = vrot.lane.b32.xlu0 %v362, 17
    %v410 = vpop.permute.xlu0 %409
    %411 = vrot.lane.b32.xlu0 %v366, 17
    %v412 = vpop.permute.xlu0 %411
    %413 = vrot.lane.b32.xlu0 %v370, 17
    %v414 = vpop.permute.xlu0 %413
    %415 = vrot.lane.b32.xlu0 %v374, 17
    %v416 = vpop.permute.xlu0 %415
    %417 = vrot.lane.b32.xlu0 %v378, 17
    %v418 = vpop.permute.xlu0 %417
    %419 = vrot.lane.b32.xlu0 %v382, 17
    %v420 = vpop.permute.xlu0 %419
    %421 = vrot.lane.b32.xlu0 %v351, 17
    %v422 = vpop.permute.xlu0 %421
    %423 = vrot.lane.b32.xlu0 %v355, 17
    %v424 = vpop.permute.xlu0 %423
    %425 = vrot.lane.b32.xlu0 %v359, 17
    %v426 = vpop.permute.xlu0 %425
    %427 = vrot.lane.b32.xlu0 %v363, 17
    %v428 = vpop.permute.xlu0 %427
    %429 = vrot.lane.b32.xlu0 %v367, 17
    %v430 = vpop.permute.xlu0 %429
    %431 = vrot.lane.b32.xlu0 %v371, 17
    %v432 = vpop.permute.xlu0 %431
    %433 = vrot.lane.b32.xlu0 %v375, 17
    %v434 = vpop.permute.xlu0 %433
    %435 = vrot.lane.b32.xlu0 %v379, 17
    %v436 = vpop.permute.xlu0 %435
    %437 = vrot.lane.b32.xlu0 %v383, 17
    %v438 = vpop.permute.xlu0 %437
    %439 = vrot.lane.b32.xlu0 %v352, 17
    %v440 = vpop.permute.xlu0 %439
    %441 = vrot.lane.b32.xlu0 %v356, 17
    %v442 = vpop.permute.xlu0 %441
    %443 = vrot.lane.b32.xlu0 %v360, 17
    %v444 = vpop.permute.xlu0 %443
    %445 = vrot.lane.b32.xlu0 %v364, 17
    %v446 = vpop.permute.xlu0 %445
    %447 = vrot.lane.b32.xlu0 %v368, 17
    %v448 = vpop.permute.xlu0 %447
    %449 = vrot.lane.b32.xlu0 %v372, 17
    %v450 = vpop.permute.xlu0 %449
    %451 = vrot.lane.b32.xlu0 %v376, 17
    %v452 = vpop.permute.xlu0 %451
    %453 = vrot.lane.b32.xlu0 %v380, 17
    %v454 = vpop.permute.xlu0 %453
    %455 = vrot.lane.b32.xlu0 %v384, 17
    %v456 = vpop.permute.xlu0 %455
    %v457 = vlaneseq
    %v458 = vand.u32 %v457, 127
    %vm459 = vcmp.lt.s32.totalorder %v458, 17
    %v460 = vsel %vm459, %v422, %v440
    %v461 = vsel %vm459, %v424, %v442
    %v462 = vsel %vm459, %v426, %v444
    %v463 = vsel %vm459, %v428, %v446
    %v464 = vsel %vm459, %v430, %v448
    %v465 = vsel %vm459, %v432, %v450
    %v466 = vsel %vm459, %v434, %v452
    %v467 = vsel %vm459, %v436, %v454
    %v468 = vsel %vm459, %v438, %v456
    %v469 = vsel %vm459, %v404, %v422
    %v470 = vsel %vm459, %v406, %v424
    %v471 = vsel %vm459, %v408, %v426
    %v472 = vsel %vm459, %v410, %v428
    %v473 = vsel %vm459, %v412, %v430
    %v474 = vsel %vm459, %v414, %v432
    %v475 = vsel %vm459, %v416, %v434
    %v476 = vsel %vm459, %v418, %v436
    %v477 = vsel %vm459, %v420, %v438
    %v478 = vsel %vm459, %v386, %v404
    %v479 = vsel %vm459, %v388, %v406
    %v480 = vsel %vm459, %v390, %v408
    %v481 = vsel %vm459, %v392, %v410
    %v482 = vsel %vm459, %v394, %v412
    %v483 = vsel %vm459, %v396, %v414
    %v484 = vsel %vm459, %v398, %v416
    %v485 = vsel %vm459, %v400, %v418
    %v486 = vsel %vm459, %v402, %v420
    %v487 = vsel %vm459, %v440, %v386
    %v488 = vsel %vm459, %v442, %v388
    %v489 = vsel %vm459, %v444, %v390
    %v490 = vsel %vm459, %v446, %v392
    %v491 = vsel %vm459, %v448, %v394
    %v492 = vsel %vm459, %v450, %v396
    %v493 = vsel %vm459, %v452, %v398
    %v494 = vsel %vm459, %v454, %v400
    %v495 = vsel %vm459, %v456, %v402
    %v496 = vld [vmem:[%s6] sm:$0xf]
    %v498 = vlaneseq
    %v499 = vshrl.u32 %v498, 7
    %v500 = vsub.s32 0, %v499
    %v501 = vrot.slane %v496, %v500
    %v502 = vlaneseq
    %v503 = vshrl.u32 %v502, 7
    %v504 = vsub.s32 1, %v503
    %v505 = vrot.slane %v496, %v504
    %v506 = vlaneseq
    %v507 = vshrl.u32 %v506, 7
    %v508 = vsub.s32 2, %v507
    %v509 = vrot.slane %v496, %v508
    %v510 = vlaneseq
    %v511 = vshrl.u32 %v510, 7
    %v512 = vsub.s32 3, %v511
    %v513 = vrot.slane %v496, %v512
    %v518 = vmul.f32 %v487, %v501
    %v519 = vmul.f32 %v478, %v505
    %v520 = vmul.f32 %v469, %v509
    %v521 = vmul.f32 %v460, %v513
    %v522 = vmul.f32 %v488, %v501
    %v523 = vmul.f32 %v479, %v505
    %v524 = vmul.f32 %v470, %v509
    %v525 = vmul.f32 %v461, %v513
    %v526 = vmul.f32 %v489, %v501
    %v527 = vmul.f32 %v480, %v505
    %v528 = vmul.f32 %v471, %v509
    %v529 = vmul.f32 %v462, %v513
    %v530 = vmul.f32 %v490, %v501
    %v531 = vmul.f32 %v481, %v505
    %v532 = vmul.f32 %v472, %v509
    %v533 = vmul.f32 %v463, %v513
    %v534 = vmul.f32 %v491, %v501
    %v535 = vmul.f32 %v482, %v505
    %v536 = vmul.f32 %v473, %v509
    %v537 = vmul.f32 %v464, %v513
    %v538 = vmul.f32 %v492, %v501
    %v539 = vmul.f32 %v483, %v505
    %v540 = vmul.f32 %v474, %v509
    %v541 = vmul.f32 %v465, %v513
    %v542 = vmul.f32 %v493, %v501
    %v543 = vmul.f32 %v484, %v505
    %v544 = vmul.f32 %v475, %v509
    %v545 = vmul.f32 %v466, %v513
    %v546 = vmul.f32 %v494, %v501
    %v547 = vmul.f32 %v485, %v505
    %v548 = vmul.f32 %v476, %v509
    %v549 = vmul.f32 %v467, %v513
    %v550 = vmul.f32 %v495, %v501
    %v551 = vmul.f32 %v486, %v505
    %v552 = vmul.f32 %v477, %v509
    %v553 = vmul.f32 %v468, %v513
    %554 = vrot.lane.b32.xlu0 %v349, 16
    %v555 = vpop.permute.xlu0 %554
    %556 = vrot.lane.b32.xlu0 %v353, 16
    %v557 = vpop.permute.xlu0 %556
    %558 = vrot.lane.b32.xlu0 %v357, 16
    %v559 = vpop.permute.xlu0 %558
    %560 = vrot.lane.b32.xlu0 %v361, 16
    %v561 = vpop.permute.xlu0 %560
    %562 = vrot.lane.b32.xlu0 %v365, 16
    %v563 = vpop.permute.xlu0 %562
    %564 = vrot.lane.b32.xlu0 %v369, 16
    %v565 = vpop.permute.xlu0 %564
    %566 = vrot.lane.b32.xlu0 %v373, 16
    %v567 = vpop.permute.xlu0 %566
    %568 = vrot.lane.b32.xlu0 %v377, 16
    %v569 = vpop.permute.xlu0 %568
    %570 = vrot.lane.b32.xlu0 %v381, 16
    %v571 = vpop.permute.xlu0 %570
    %572 = vrot.lane.b32.xlu0 %v350, 16
    %v573 = vpop.permute.xlu0 %572
    %574 = vrot.lane.b32.xlu0 %v354, 16
    %v575 = vpop.permute.xlu0 %574
    %576 = vrot.lane.b32.xlu0 %v358, 16
    %v577 = vpop.permute.xlu0 %576
    %578 = vrot.lane.b32.xlu0 %v362, 16
    %v579 = vpop.permute.xlu0 %578
    %580 = vrot.lane.b32.xlu0 %v366, 16
    %v581 = vpop.permute.xlu0 %580
    %582 = vrot.lane.b32.xlu0 %v370, 16
    %v583 = vpop.permute.xlu0 %582
    %584 = vrot.lane.b32.xlu0 %v374, 16
    %v585 = vpop.permute.xlu0 %584
    %586 = vrot.lane.b32.xlu0 %v378, 16
    %v587 = vpop.permute.xlu0 %586
    %588 = vrot.lane.b32.xlu0 %v382, 16
    %v589 = vpop.permute.xlu0 %588
    %590 = vrot.lane.b32.xlu0 %v351, 16
    %v591 = vpop.permute.xlu0 %590
    %592 = vrot.lane.b32.xlu0 %v355, 16
    %v593 = vpop.permute.xlu0 %592
    %594 = vrot.lane.b32.xlu0 %v359, 16
    %v595 = vpop.permute.xlu0 %594
    %596 = vrot.lane.b32.xlu0 %v363, 16
    %v597 = vpop.permute.xlu0 %596
    %598 = vrot.lane.b32.xlu0 %v367, 16
    %v599 = vpop.permute.xlu0 %598
    %600 = vrot.lane.b32.xlu0 %v371, 16
    %v601 = vpop.permute.xlu0 %600
    %602 = vrot.lane.b32.xlu0 %v375, 16
    %v603 = vpop.permute.xlu0 %602
    %604 = vrot.lane.b32.xlu0 %v379, 16
    %v605 = vpop.permute.xlu0 %604
    %606 = vrot.lane.b32.xlu0 %v383, 16
    %v607 = vpop.permute.xlu0 %606
    %608 = vrot.lane.b32.xlu0 %v352, 16
    %v609 = vpop.permute.xlu0 %608
    %610 = vrot.lane.b32.xlu0 %v356, 16
    %v611 = vpop.permute.xlu0 %610
    %612 = vrot.lane.b32.xlu0 %v360, 16
    %v613 = vpop.permute.xlu0 %612
    %614 = vrot.lane.b32.xlu0 %v364, 16
    %v615 = vpop.permute.xlu0 %614
    %616 = vrot.lane.b32.xlu0 %v368, 16
    %v617 = vpop.permute.xlu0 %616
    %618 = vrot.lane.b32.xlu0 %v372, 16
    %v619 = vpop.permute.xlu0 %618
    %620 = vrot.lane.b32.xlu0 %v376, 16
    %v621 = vpop.permute.xlu0 %620
    %622 = vrot.lane.b32.xlu0 %v380, 16
    %v623 = vpop.permute.xlu0 %622
    %624 = vrot.lane.b32.xlu0 %v384, 16
    %v625 = vpop.permute.xlu0 %624
    %vm626 = vcmp.lt.s32.totalorder %v458, 16
    %v627 = vsel %vm626, %v591, %v609
    %v628 = vsel %vm626, %v593, %v611
    %v629 = vsel %vm626, %v595, %v613
    %v630 = vsel %vm626, %v597, %v615
    %v631 = vsel %vm626, %v599, %v617
    %v632 = vsel %vm626, %v601, %v619
    %v633 = vsel %vm626, %v603, %v621
    %v634 = vsel %vm626, %v605, %v623
    %v635 = vsel %vm626, %v607, %v625
    %v636 = vsel %vm626, %v573, %v591
    %v637 = vsel %vm626, %v575, %v593
    %v638 = vsel %vm626, %v577, %v595
    %v639 = vsel %vm626, %v579, %v597
    %v640 = vsel %vm626, %v581, %v599
    %v641 = vsel %vm626, %v583, %v601
    %v642 = vsel %vm626, %v585, %v603
    %v643 = vsel %vm626, %v587, %v605
    %v644 = vsel %vm626, %v589, %v607
    %v645 = vsel %vm626, %v555, %v573
    %v646 = vsel %vm626, %v557, %v575
    %v647 = vsel %vm626, %v559, %v577
    %v648 = vsel %vm626, %v561, %v579
    %v649 = vsel %vm626, %v563, %v581
    %v650 = vsel %vm626, %v565, %v583
    %v651 = vsel %vm626, %v567, %v585
    %v652 = vsel %vm626, %v569, %v587
    %v653 = vsel %vm626, %v571, %v589
    %v654 = vsel %vm626, %v609, %v555
    %v655 = vsel %vm626, %v611, %v557
    %v656 = vsel %vm626, %v613, %v559
    %v657 = vsel %vm626, %v615, %v561
    %v658 = vsel %vm626, %v617, %v563
    %v659 = vsel %vm626, %v619, %v565
    %v660 = vsel %vm626, %v621, %v567
    %v661 = vsel %vm626, %v623, %v569
    %v662 = vsel %vm626, %v625, %v571
    %s663 = scalar_lea.vmem %s6, 4
    %v664 = vld [vmem:[%s663] sm:$0xf]
    %v666 = vlaneseq
    %v667 = vshrl.u32 %v666, 7
    %v668 = vsub.s32 0, %v667
    %v669 = vrot.slane %v664, %v668
    %v670 = vlaneseq
    %v671 = vshrl.u32 %v670, 7
    %v672 = vsub.s32 1, %v671
    %v673 = vrot.slane %v664, %v672
    %v674 = vlaneseq
    %v675 = vshrl.u32 %v674, 7
    %v676 = vsub.s32 2, %v675
    %v677 = vrot.slane %v664, %v676
    %v678 = vlaneseq
    %v679 = vshrl.u32 %v678, 7
    %v680 = vsub.s32 3, %v679
    %v681 = vrot.slane %v664, %v680
    %v686 = vmul.f32 %v654, %v669
    %v687 = vmul.f32 %v645, %v673
    %v688 = vmul.f32 %v636, %v677
    %v689 = vmul.f32 %v627, %v681
    %v690 = vmul.f32 %v655, %v669
    %v691 = vmul.f32 %v646, %v673
    %v692 = vmul.f32 %v637, %v677
    %v693 = vmul.f32 %v628, %v681
    %v694 = vmul.f32 %v656, %v669
    %v695 = vmul.f32 %v647, %v673
    %v696 = vmul.f32 %v638, %v677
    %v697 = vmul.f32 %v629, %v681
    %v698 = vmul.f32 %v657, %v669
    %v699 = vmul.f32 %v648, %v673
    %v700 = vmul.f32 %v639, %v677
    %v701 = vmul.f32 %v630, %v681
    %v702 = vmul.f32 %v658, %v669
    %v703 = vmul.f32 %v649, %v673
    %v704 = vmul.f32 %v640, %v677
    %v705 = vmul.f32 %v631, %v681
    %v706 = vmul.f32 %v659, %v669
    %v707 = vmul.f32 %v650, %v673
    %v708 = vmul.f32 %v641, %v677
    %v709 = vmul.f32 %v632, %v681
    %v710 = vmul.f32 %v660, %v669
    %v711 = vmul.f32 %v651, %v673
    %v712 = vmul.f32 %v642, %v677
    %v713 = vmul.f32 %v633, %v681
    %v714 = vmul.f32 %v661, %v669
    %v715 = vmul.f32 %v652, %v673
    %v716 = vmul.f32 %v643, %v677
    %v717 = vmul.f32 %v634, %v681
    %v718 = vmul.f32 %v662, %v669
    %v719 = vmul.f32 %v653, %v673
    %v720 = vmul.f32 %v644, %v677
    %v721 = vmul.f32 %v635, %v681
    %722 = vrot.lane.b32.xlu0 %v349, 15
    %v723 = vpop.permute.xlu0 %722
    %724 = vrot.lane.b32.xlu0 %v353, 15
    %v725 = vpop.permute.xlu0 %724
    %726 = vrot.lane.b32.xlu0 %v357, 15
    %v727 = vpop.permute.xlu0 %726
    %728 = vrot.lane.b32.xlu0 %v361, 15
    %v729 = vpop.permute.xlu0 %728
    %730 = vrot.lane.b32.xlu0 %v365, 15
    %v731 = vpop.permute.xlu0 %730
    %732 = vrot.lane.b32.xlu0 %v369, 15
    %v733 = vpop.permute.xlu0 %732
    %734 = vrot.lane.b32.xlu0 %v373, 15
    %v735 = vpop.permute.xlu0 %734
    %736 = vrot.lane.b32.xlu0 %v377, 15
    %v737 = vpop.permute.xlu0 %736
    %738 = vrot.lane.b32.xlu0 %v381, 15
    %v739 = vpop.permute.xlu0 %738
    %740 = vrot.lane.b32.xlu0 %v350, 15
    %v741 = vpop.permute.xlu0 %740
    %742 = vrot.lane.b32.xlu0 %v354, 15
    %v743 = vpop.permute.xlu0 %742
    %744 = vrot.lane.b32.xlu0 %v358, 15
    %v745 = vpop.permute.xlu0 %744
    %746 = vrot.lane.b32.xlu0 %v362, 15
    %v747 = vpop.permute.xlu0 %746
    %748 = vrot.lane.b32.xlu0 %v366, 15
    %v749 = vpop.permute.xlu0 %748
    %750 = vrot.lane.b32.xlu0 %v370, 15
    %v751 = vpop.permute.xlu0 %750
    %752 = vrot.lane.b32.xlu0 %v374, 15
    %v753 = vpop.permute.xlu0 %752
    %754 = vrot.lane.b32.xlu0 %v378, 15
    %v755 = vpop.permute.xlu0 %754
    %756 = vrot.lane.b32.xlu0 %v382, 15
    %v757 = vpop.permute.xlu0 %756
    %758 = vrot.lane.b32.xlu0 %v351, 15
    %v759 = vpop.permute.xlu0 %758
    %760 = vrot.lane.b32.xlu0 %v355, 15
    %v761 = vpop.permute.xlu0 %760
    %762 = vrot.lane.b32.xlu0 %v359, 15
    %v763 = vpop.permute.xlu0 %762
    %764 = vrot.lane.b32.xlu0 %v363, 15
    %v765 = vpop.permute.xlu0 %764
    %766 = vrot.lane.b32.xlu0 %v367, 15
    %v767 = vpop.permute.xlu0 %766
    %768 = vrot.lane.b32.xlu0 %v371, 15
    %v769 = vpop.permute.xlu0 %768
    %770 = vrot.lane.b32.xlu0 %v375, 15
    %v771 = vpop.permute.xlu0 %770
    %772 = vrot.lane.b32.xlu0 %v379, 15
    %v773 = vpop.permute.xlu0 %772
    %774 = vrot.lane.b32.xlu0 %v383, 15
    %v775 = vpop.permute.xlu0 %774
    %776 = vrot.lane.b32.xlu0 %v352, 15
    %v777 = vpop.permute.xlu0 %776
    %778 = vrot.lane.b32.xlu0 %v356, 15
    %v779 = vpop.permute.xlu0 %778
    %780 = vrot.lane.b32.xlu0 %v360, 15
    %v781 = vpop.permute.xlu0 %780
    %782 = vrot.lane.b32.xlu0 %v364, 15
    %v783 = vpop.permute.xlu0 %782
    %784 = vrot.lane.b32.xlu0 %v368, 15
    %v785 = vpop.permute.xlu0 %784
    %786 = vrot.lane.b32.xlu0 %v372, 15
    %v787 = vpop.permute.xlu0 %786
    %788 = vrot.lane.b32.xlu0 %v376, 15
    %v789 = vpop.permute.xlu0 %788
    %790 = vrot.lane.b32.xlu0 %v380, 15
    %v791 = vpop.permute.xlu0 %790
    %792 = vrot.lane.b32.xlu0 %v384, 15
    %v793 = vpop.permute.xlu0 %792
    %vm794 = vcmp.lt.s32.totalorder %v458, 15
    %v795 = vsel %vm794, %v759, %v777
    %v796 = vsel %vm794, %v761, %v779
    %v797 = vsel %vm794, %v763, %v781
    %v798 = vsel %vm794, %v765, %v783
    %v799 = vsel %vm794, %v767, %v785
    %v800 = vsel %vm794, %v769, %v787
    %v801 = vsel %vm794, %v771, %v789
    %v802 = vsel %vm794, %v773, %v791
    %v803 = vsel %vm794, %v775, %v793
    %v804 = vsel %vm794, %v741, %v759
    %v805 = vsel %vm794, %v743, %v761
    %v806 = vsel %vm794, %v745, %v763
    %v807 = vsel %vm794, %v747, %v765
    %v808 = vsel %vm794, %v749, %v767
    %v809 = vsel %vm794, %v751, %v769
    %v810 = vsel %vm794, %v753, %v771
    %v811 = vsel %vm794, %v755, %v773
    %v812 = vsel %vm794, %v757, %v775
    %v813 = vsel %vm794, %v723, %v741
    %v814 = vsel %vm794, %v725, %v743
    %v815 = vsel %vm794, %v727, %v745
    %v816 = vsel %vm794, %v729, %v747
    %v817 = vsel %vm794, %v731, %v749
    %v818 = vsel %vm794, %v733, %v751
    %v819 = vsel %vm794, %v735, %v753
    %v820 = vsel %vm794, %v737, %v755
    %v821 = vsel %vm794, %v739, %v757
    %v822 = vsel %vm794, %v777, %v723
    %v823 = vsel %vm794, %v779, %v725
    %v824 = vsel %vm794, %v781, %v727
    %v825 = vsel %vm794, %v783, %v729
    %v826 = vsel %vm794, %v785, %v731
    %v827 = vsel %vm794, %v787, %v733
    %v828 = vsel %vm794, %v789, %v735
    %v829 = vsel %vm794, %v791, %v737
    %v830 = vsel %vm794, %v793, %v739
    %s831 = scalar_lea.vmem %s6, 8
    %v832 = vld [vmem:[%s831] sm:$0xf]
    %v834 = vlaneseq
    %v835 = vshrl.u32 %v834, 7
    %v836 = vsub.s32 0, %v835
    %v837 = vrot.slane %v832, %v836
    %v838 = vlaneseq
    %v839 = vshrl.u32 %v838, 7
    %v840 = vsub.s32 1, %v839
    %v841 = vrot.slane %v832, %v840
    %v842 = vlaneseq
    %v843 = vshrl.u32 %v842, 7
    %v844 = vsub.s32 2, %v843
    %v845 = vrot.slane %v832, %v844
    %v846 = vlaneseq
    %v847 = vshrl.u32 %v846, 7
    %v848 = vsub.s32 3, %v847
    %v849 = vrot.slane %v832, %v848
    %v854 = vmul.f32 %v822, %v837
    %v855 = vmul.f32 %v813, %v841
    %v856 = vmul.f32 %v804, %v845
    %v857 = vmul.f32 %v795, %v849
    %v858 = vmul.f32 %v823, %v837
    %v859 = vmul.f32 %v814, %v841
    %v860 = vmul.f32 %v805, %v845
    %v861 = vmul.f32 %v796, %v849
    %v862 = vmul.f32 %v824, %v837
    %v863 = vmul.f32 %v815, %v841
    %v864 = vmul.f32 %v806, %v845
    %v865 = vmul.f32 %v797, %v849
    %v866 = vmul.f32 %v825, %v837
    %v867 = vmul.f32 %v816, %v841
    %v868 = vmul.f32 %v807, %v845
    %v869 = vmul.f32 %v798, %v849
    %v870 = vmul.f32 %v826, %v837
    %v871 = vmul.f32 %v817, %v841
    %v872 = vmul.f32 %v808, %v845
    %v873 = vmul.f32 %v799, %v849
    %v874 = vmul.f32 %v827, %v837
    %v875 = vmul.f32 %v818, %v841
    %v876 = vmul.f32 %v809, %v845
    %v877 = vmul.f32 %v800, %v849
    %v878 = vmul.f32 %v828, %v837
    %v879 = vmul.f32 %v819, %v841
    %v880 = vmul.f32 %v810, %v845
    %v881 = vmul.f32 %v801, %v849
    %v882 = vmul.f32 %v829, %v837
    %v883 = vmul.f32 %v820, %v841
    %v884 = vmul.f32 %v811, %v845
    %v885 = vmul.f32 %v802, %v849
    %v886 = vmul.f32 %v830, %v837
    %v887 = vmul.f32 %v821, %v841
    %v888 = vmul.f32 %v812, %v845
    %v889 = vmul.f32 %v803, %v849
    %890 = vrot.lane.b32.xlu0 %v349, 1
    %v891 = vpop.permute.xlu0 %890
    %892 = vrot.lane.b32.xlu0 %v353, 1
    %v893 = vpop.permute.xlu0 %892
    %894 = vrot.lane.b32.xlu0 %v357, 1
    %v895 = vpop.permute.xlu0 %894
    %896 = vrot.lane.b32.xlu0 %v361, 1
    %v897 = vpop.permute.xlu0 %896
    %898 = vrot.lane.b32.xlu0 %v365, 1
    %v899 = vpop.permute.xlu0 %898
    %900 = vrot.lane.b32.xlu0 %v369, 1
    %v901 = vpop.permute.xlu0 %900
    %902 = vrot.lane.b32.xlu0 %v373, 1
    %v903 = vpop.permute.xlu0 %902
    %904 = vrot.lane.b32.xlu0 %v377, 1
    %v905 = vpop.permute.xlu0 %904
    %906 = vrot.lane.b32.xlu0 %v381, 1
    %v907 = vpop.permute.xlu0 %906
    %908 = vrot.lane.b32.xlu0 %v350, 1
    %v909 = vpop.permute.xlu0 %908
    %910 = vrot.lane.b32.xlu0 %v354, 1
    %v911 = vpop.permute.xlu0 %910
    %912 = vrot.lane.b32.xlu0 %v358, 1
    %v913 = vpop.permute.xlu0 %912
    %914 = vrot.lane.b32.xlu0 %v362, 1
    %v915 = vpop.permute.xlu0 %914
    %916 = vrot.lane.b32.xlu0 %v366, 1
    %v917 = vpop.permute.xlu0 %916
    %918 = vrot.lane.b32.xlu0 %v370, 1
    %v919 = vpop.permute.xlu0 %918
    %920 = vrot.lane.b32.xlu0 %v374, 1
    %v921 = vpop.permute.xlu0 %920
    %922 = vrot.lane.b32.xlu0 %v378, 1
    %v923 = vpop.permute.xlu0 %922
    %924 = vrot.lane.b32.xlu0 %v382, 1
    %v925 = vpop.permute.xlu0 %924
    %926 = vrot.lane.b32.xlu0 %v351, 1
    %v927 = vpop.permute.xlu0 %926
    %928 = vrot.lane.b32.xlu0 %v355, 1
    %v929 = vpop.permute.xlu0 %928
    %930 = vrot.lane.b32.xlu0 %v359, 1
    %v931 = vpop.permute.xlu0 %930
    %932 = vrot.lane.b32.xlu0 %v363, 1
    %v933 = vpop.permute.xlu0 %932
    %934 = vrot.lane.b32.xlu0 %v367, 1
    %v935 = vpop.permute.xlu0 %934
    %936 = vrot.lane.b32.xlu0 %v371, 1
    %v937 = vpop.permute.xlu0 %936
    %938 = vrot.lane.b32.xlu0 %v375, 1
    %v939 = vpop.permute.xlu0 %938
    %940 = vrot.lane.b32.xlu0 %v379, 1
    %v941 = vpop.permute.xlu0 %940
    %942 = vrot.lane.b32.xlu0 %v383, 1
    %v943 = vpop.permute.xlu0 %942
    %944 = vrot.lane.b32.xlu0 %v352, 1
    %v945 = vpop.permute.xlu0 %944
    %946 = vrot.lane.b32.xlu0 %v356, 1
    %v947 = vpop.permute.xlu0 %946
    %948 = vrot.lane.b32.xlu0 %v360, 1
    %v949 = vpop.permute.xlu0 %948
    %950 = vrot.lane.b32.xlu0 %v364, 1
    %v951 = vpop.permute.xlu0 %950
    %952 = vrot.lane.b32.xlu0 %v368, 1
    %v953 = vpop.permute.xlu0 %952
    %954 = vrot.lane.b32.xlu0 %v372, 1
    %v955 = vpop.permute.xlu0 %954
    %956 = vrot.lane.b32.xlu0 %v376, 1
    %v957 = vpop.permute.xlu0 %956
    %958 = vrot.lane.b32.xlu0 %v380, 1
    %v959 = vpop.permute.xlu0 %958
    %960 = vrot.lane.b32.xlu0 %v384, 1
    %v961 = vpop.permute.xlu0 %960
    %vm962 = vcmp.lt.s32.totalorder %v458, 1
    %v963 = vsel %vm962, %v927, %v945
    %v964 = vsel %vm962, %v929, %v947
    %v965 = vsel %vm962, %v931, %v949
    %v966 = vsel %vm962, %v933, %v951
    %v967 = vsel %vm962, %v935, %v953
    %v968 = vsel %vm962, %v937, %v955
    %v969 = vsel %vm962, %v939, %v957
    %v970 = vsel %vm962, %v941, %v959
    %v971 = vsel %vm962, %v943, %v961
    %v972 = vsel %vm962, %v909, %v927
    %v973 = vsel %vm962, %v911, %v929
    %v974 = vsel %vm962, %v913, %v931
    %v975 = vsel %vm962, %v915, %v933
    %v976 = vsel %vm962, %v917, %v935
    %v977 = vsel %vm962, %v919, %v937
    %v978 = vsel %vm962, %v921, %v939
    %v979 = vsel %vm962, %v923, %v941
    %v980 = vsel %vm962, %v925, %v943
    %v981 = vsel %vm962, %v891, %v909
    %v982 = vsel %vm962, %v893, %v911
    %v983 = vsel %vm962, %v895, %v913
    %v984 = vsel %vm962, %v897, %v915
    %v985 = vsel %vm962, %v899, %v917
    %v986 = vsel %vm962, %v901, %v919
    %v987 = vsel %vm962, %v903, %v921
    %v988 = vsel %vm962, %v905, %v923
    %v989 = vsel %vm962, %v907, %v925
    %v990 = vsel %vm962, %v945, %v891
    %v991 = vsel %vm962, %v947, %v893
    %v992 = vsel %vm962, %v949, %v895
    %v993 = vsel %vm962, %v951, %v897
    %v994 = vsel %vm962, %v953, %v899
    %v995 = vsel %vm962, %v955, %v901
    %v996 = vsel %vm962, %v957, %v903
    %v997 = vsel %vm962, %v959, %v905
    %v998 = vsel %vm962, %v961, %v907
    %s999 = scalar_lea.vmem %s6, 12
    %v1000 = vld [vmem:[%s999] sm:$0xf]
    %v1002 = vlaneseq
    %v1003 = vshrl.u32 %v1002, 7
    %v1004 = vsub.s32 0, %v1003
    %v1005 = vrot.slane %v1000, %v1004
    %v1006 = vlaneseq
    %v1007 = vshrl.u32 %v1006, 7
    %v1008 = vsub.s32 1, %v1007
    %v1009 = vrot.slane %v1000, %v1008
    %v1010 = vlaneseq
    %v1011 = vshrl.u32 %v1010, 7
    %v1012 = vsub.s32 2, %v1011
    %v1013 = vrot.slane %v1000, %v1012
    %v1014 = vlaneseq
    %v1015 = vshrl.u32 %v1014, 7
    %v1016 = vsub.s32 3, %v1015
    %v1017 = vrot.slane %v1000, %v1016
    %v1022 = vmul.f32 %v990, %v1005
    %v1023 = vmul.f32 %v981, %v1009
    %v1024 = vmul.f32 %v972, %v1013
    %v1025 = vmul.f32 %v963, %v1017
    %v1026 = vmul.f32 %v991, %v1005
    %v1027 = vmul.f32 %v982, %v1009
    %v1028 = vmul.f32 %v973, %v1013
    %v1029 = vmul.f32 %v964, %v1017
    %v1030 = vmul.f32 %v992, %v1005
    %v1031 = vmul.f32 %v983, %v1009
    %v1032 = vmul.f32 %v974, %v1013
    %v1033 = vmul.f32 %v965, %v1017
    %v1034 = vmul.f32 %v993, %v1005
    %v1035 = vmul.f32 %v984, %v1009
    %v1036 = vmul.f32 %v975, %v1013
    %v1037 = vmul.f32 %v966, %v1017
    %v1038 = vmul.f32 %v994, %v1005
    %v1039 = vmul.f32 %v985, %v1009
    %v1040 = vmul.f32 %v976, %v1013
    %v1041 = vmul.f32 %v967, %v1017
    %v1042 = vmul.f32 %v995, %v1005
    %v1043 = vmul.f32 %v986, %v1009
    %v1044 = vmul.f32 %v977, %v1013
    %v1045 = vmul.f32 %v968, %v1017
    %v1046 = vmul.f32 %v996, %v1005
    %v1047 = vmul.f32 %v987, %v1009
    %v1048 = vmul.f32 %v978, %v1013
    %v1049 = vmul.f32 %v969, %v1017
    %v1050 = vmul.f32 %v997, %v1005
    %v1051 = vmul.f32 %v988, %v1009
    %v1052 = vmul.f32 %v979, %v1013
    %v1053 = vmul.f32 %v970, %v1017
    %v1054 = vmul.f32 %v998, %v1005
    %v1055 = vmul.f32 %v989, %v1009
    %v1056 = vmul.f32 %v980, %v1013
    %v1057 = vmul.f32 %v971, %v1017
    %s1058 = scalar_lea.vmem %s6, 16
    %v1059 = vld [vmem:[%s1058] sm:$0xf]
    %v1061 = vlaneseq
    %v1062 = vshrl.u32 %v1061, 7
    %v1063 = vsub.s32 0, %v1062
    %v1064 = vrot.slane %v1059, %v1063
    %v1065 = vlaneseq
    %v1066 = vshrl.u32 %v1065, 7
    %v1067 = vsub.s32 1, %v1066
    %v1068 = vrot.slane %v1059, %v1067
    %v1069 = vlaneseq
    %v1070 = vshrl.u32 %v1069, 7
    %v1071 = vsub.s32 2, %v1070
    %v1072 = vrot.slane %v1059, %v1071
    %v1073 = vlaneseq
    %v1074 = vshrl.u32 %v1073, 7
    %v1075 = vsub.s32 3, %v1074
    %v1076 = vrot.slane %v1059, %v1075
    %v1081 = vmul.f32 %v349, %v1064
    %v1082 = vmul.f32 %v350, %v1068
    %v1083 = vmul.f32 %v351, %v1072
    %v1084 = vmul.f32 %v352, %v1076
    %v1085 = vmul.f32 %v353, %v1064
    %v1086 = vmul.f32 %v354, %v1068
    %v1087 = vmul.f32 %v355, %v1072
    %v1088 = vmul.f32 %v356, %v1076
    %v1089 = vmul.f32 %v357, %v1064
    %v1090 = vmul.f32 %v358, %v1068
    %v1091 = vmul.f32 %v359, %v1072
    %v1092 = vmul.f32 %v360, %v1076
    %v1093 = vmul.f32 %v361, %v1064
    %v1094 = vmul.f32 %v362, %v1068
    %v1095 = vmul.f32 %v363, %v1072
    %v1096 = vmul.f32 %v364, %v1076
    %v1097 = vmul.f32 %v365, %v1064
    %v1098 = vmul.f32 %v366, %v1068
    %v1099 = vmul.f32 %v367, %v1072
    %v1100 = vmul.f32 %v368, %v1076
    %v1101 = vmul.f32 %v369, %v1064
    %v1102 = vmul.f32 %v370, %v1068
    %v1103 = vmul.f32 %v371, %v1072
    %v1104 = vmul.f32 %v372, %v1076
    %v1105 = vmul.f32 %v373, %v1064
    %v1106 = vmul.f32 %v374, %v1068
    %v1107 = vmul.f32 %v375, %v1072
    %v1108 = vmul.f32 %v376, %v1076
    %v1109 = vmul.f32 %v377, %v1064
    %v1110 = vmul.f32 %v378, %v1068
    %v1111 = vmul.f32 %v379, %v1072
    %v1112 = vmul.f32 %v380, %v1076
    %v1113 = vmul.f32 %v381, %v1064
    %v1114 = vmul.f32 %v382, %v1068
    %v1115 = vmul.f32 %v383, %v1072
    %v1116 = vmul.f32 %v384, %v1076
    %1117 = vrot.lane.b32.xlu0 %v349, 127
    %v1118 = vpop.permute.xlu0 %1117
    %1119 = vrot.lane.b32.xlu0 %v353, 127
    %v1120 = vpop.permute.xlu0 %1119
    %1121 = vrot.lane.b32.xlu0 %v357, 127
    %v1122 = vpop.permute.xlu0 %1121
    %1123 = vrot.lane.b32.xlu0 %v361, 127
    %v1124 = vpop.permute.xlu0 %1123
    %1125 = vrot.lane.b32.xlu0 %v365, 127
    %v1126 = vpop.permute.xlu0 %1125
    %1127 = vrot.lane.b32.xlu0 %v369, 127
    %v1128 = vpop.permute.xlu0 %1127
    %1129 = vrot.lane.b32.xlu0 %v373, 127
    %v1130 = vpop.permute.xlu0 %1129
    %1131 = vrot.lane.b32.xlu0 %v377, 127
    %v1132 = vpop.permute.xlu0 %1131
    %1133 = vrot.lane.b32.xlu0 %v381, 127
    %v1134 = vpop.permute.xlu0 %1133
    %1135 = vrot.lane.b32.xlu0 %v350, 127
    %v1136 = vpop.permute.xlu0 %1135
    %1137 = vrot.lane.b32.xlu0 %v354, 127
    %v1138 = vpop.permute.xlu0 %1137
    %1139 = vrot.lane.b32.xlu0 %v358, 127
    %v1140 = vpop.permute.xlu0 %1139
    %1141 = vrot.lane.b32.xlu0 %v362, 127
    %v1142 = vpop.permute.xlu0 %1141
    %1143 = vrot.lane.b32.xlu0 %v366, 127
    %v1144 = vpop.permute.xlu0 %1143
    %1145 = vrot.lane.b32.xlu0 %v370, 127
    %v1146 = vpop.permute.xlu0 %1145
    %1147 = vrot.lane.b32.xlu0 %v374, 127
    %v1148 = vpop.permute.xlu0 %1147
    %1149 = vrot.lane.b32.xlu0 %v378, 127
    %v1150 = vpop.permute.xlu0 %1149
    %1151 = vrot.lane.b32.xlu0 %v382, 127
    %v1152 = vpop.permute.xlu0 %1151
    %1153 = vrot.lane.b32.xlu0 %v351, 127
    %v1154 = vpop.permute.xlu0 %1153
    %1155 = vrot.lane.b32.xlu0 %v355, 127
    %v1156 = vpop.permute.xlu0 %1155
    %1157 = vrot.lane.b32.xlu0 %v359, 127
    %v1158 = vpop.permute.xlu0 %1157
    %1159 = vrot.lane.b32.xlu0 %v363, 127
    %v1160 = vpop.permute.xlu0 %1159
    %1161 = vrot.lane.b32.xlu0 %v367, 127
    %v1162 = vpop.permute.xlu0 %1161
    %1163 = vrot.lane.b32.xlu0 %v371, 127
    %v1164 = vpop.permute.xlu0 %1163
    %1165 = vrot.lane.b32.xlu0 %v375, 127
    %v1166 = vpop.permute.xlu0 %1165
    %1167 = vrot.lane.b32.xlu0 %v379, 127
    %v1168 = vpop.permute.xlu0 %1167
    %1169 = vrot.lane.b32.xlu0 %v383, 127
    %v1170 = vpop.permute.xlu0 %1169
    %1171 = vrot.lane.b32.xlu0 %v352, 127
    %v1172 = vpop.permute.xlu0 %1171
    %1173 = vrot.lane.b32.xlu0 %v356, 127
    %v1174 = vpop.permute.xlu0 %1173
    %1175 = vrot.lane.b32.xlu0 %v360, 127
    %v1176 = vpop.permute.xlu0 %1175
    %1177 = vrot.lane.b32.xlu0 %v364, 127
    %v1178 = vpop.permute.xlu0 %1177
    %1179 = vrot.lane.b32.xlu0 %v368, 127
    %v1180 = vpop.permute.xlu0 %1179
    %1181 = vrot.lane.b32.xlu0 %v372, 127
    %v1182 = vpop.permute.xlu0 %1181
    %1183 = vrot.lane.b32.xlu0 %v376, 127
    %v1184 = vpop.permute.xlu0 %1183
    %1185 = vrot.lane.b32.xlu0 %v380, 127
    %v1186 = vpop.permute.xlu0 %1185
    %1187 = vrot.lane.b32.xlu0 %v384, 127
    %v1188 = vpop.permute.xlu0 %1187
    %vm1189 = vcmp.lt.s32.totalorder %v458, 127
    %v1190 = vsel %vm1189, %v1154, %v1172
    %v1191 = vsel %vm1189, %v1156, %v1174
    %v1192 = vsel %vm1189, %v1158, %v1176
    %v1193 = vsel %vm1189, %v1160, %v1178
    %v1194 = vsel %vm1189, %v1162, %v1180
    %v1195 = vsel %vm1189, %v1164, %v1182
    %v1196 = vsel %vm1189, %v1166, %v1184
    %v1197 = vsel %vm1189, %v1168, %v1186
    %v1198 = vsel %vm1189, %v1170, %v1188
    %v1199 = vsel %vm1189, %v1136, %v1154
    %v1200 = vsel %vm1189, %v1138, %v1156
    %v1201 = vsel %vm1189, %v1140, %v1158
    %v1202 = vsel %vm1189, %v1142, %v1160
    %v1203 = vsel %vm1189, %v1144, %v1162
    %v1204 = vsel %vm1189, %v1146, %v1164
    %v1205 = vsel %vm1189, %v1148, %v1166
    %v1206 = vsel %vm1189, %v1150, %v1168
    %v1207 = vsel %vm1189, %v1152, %v1170
    %v1208 = vsel %vm1189, %v1118, %v1136
    %v1209 = vsel %vm1189, %v1120, %v1138
    %v1210 = vsel %vm1189, %v1122, %v1140
    %v1211 = vsel %vm1189, %v1124, %v1142
    %v1212 = vsel %vm1189, %v1126, %v1144
    %v1213 = vsel %vm1189, %v1128, %v1146
    %v1214 = vsel %vm1189, %v1130, %v1148
    %v1215 = vsel %vm1189, %v1132, %v1150
    %v1216 = vsel %vm1189, %v1134, %v1152
    %v1217 = vsel %vm1189, %v1172, %v1118
    %v1218 = vsel %vm1189, %v1174, %v1120
    %v1219 = vsel %vm1189, %v1176, %v1122
    %v1220 = vsel %vm1189, %v1178, %v1124
    %v1221 = vsel %vm1189, %v1180, %v1126
    %v1222 = vsel %vm1189, %v1182, %v1128
    %v1223 = vsel %vm1189, %v1184, %v1130
    %v1224 = vsel %vm1189, %v1186, %v1132
    %v1225 = vsel %vm1189, %v1188, %v1134
    %s1226 = scalar_lea.vmem %s6, 20
    %v1227 = vld [vmem:[%s1226] sm:$0xf]
    %v1229 = vlaneseq
    %v1230 = vshrl.u32 %v1229, 7
    %v1231 = vsub.s32 0, %v1230
    %v1232 = vrot.slane %v1227, %v1231
    %v1233 = vlaneseq
    %v1234 = vshrl.u32 %v1233, 7
    %v1235 = vsub.s32 1, %v1234
    %v1236 = vrot.slane %v1227, %v1235
    %v1237 = vlaneseq
    %v1238 = vshrl.u32 %v1237, 7
    %v1239 = vsub.s32 2, %v1238
    %v1240 = vrot.slane %v1227, %v1239
    %v1241 = vlaneseq
    %v1242 = vshrl.u32 %v1241, 7
    %v1243 = vsub.s32 3, %v1242
    %v1244 = vrot.slane %v1227, %v1243
    %v1249 = vmul.f32 %v1208, %v1232
    %v1250 = vmul.f32 %v1199, %v1236
    %v1251 = vmul.f32 %v1190, %v1240
    %v1252 = vmul.f32 %v1217, %v1244
    %v1253 = vmul.f32 %v1209, %v1232
    %v1254 = vmul.f32 %v1200, %v1236
    %v1255 = vmul.f32 %v1191, %v1240
    %v1256 = vmul.f32 %v1218, %v1244
    %v1257 = vmul.f32 %v1210, %v1232
    %v1258 = vmul.f32 %v1201, %v1236
    %v1259 = vmul.f32 %v1192, %v1240
    %v1260 = vmul.f32 %v1219, %v1244
    %v1261 = vmul.f32 %v1211, %v1232
    %v1262 = vmul.f32 %v1202, %v1236
    %v1263 = vmul.f32 %v1193, %v1240
    %v1264 = vmul.f32 %v1220, %v1244
    %v1265 = vmul.f32 %v1212, %v1232
    %v1266 = vmul.f32 %v1203, %v1236
    %v1267 = vmul.f32 %v1194, %v1240
    %v1268 = vmul.f32 %v1221, %v1244
    %v1269 = vmul.f32 %v1213, %v1232
    %v1270 = vmul.f32 %v1204, %v1236
    %v1271 = vmul.f32 %v1195, %v1240
    %v1272 = vmul.f32 %v1222, %v1244
    %v1273 = vmul.f32 %v1214, %v1232
    %v1274 = vmul.f32 %v1205, %v1236
    %v1275 = vmul.f32 %v1196, %v1240
    %v1276 = vmul.f32 %v1223, %v1244
    %v1277 = vmul.f32 %v1215, %v1232
    %v1278 = vmul.f32 %v1206, %v1236
    %v1279 = vmul.f32 %v1197, %v1240
    %v1280 = vmul.f32 %v1224, %v1244
    %v1281 = vmul.f32 %v1216, %v1232
    %v1282 = vmul.f32 %v1207, %v1236
    %v1283 = vmul.f32 %v1198, %v1240
    %v1284 = vmul.f32 %v1225, %v1244
    %1285 = vrot.lane.b32.xlu0 %v349, 113
    %v1286 = vpop.permute.xlu0 %1285
    %1287 = vrot.lane.b32.xlu0 %v353, 113
    %v1288 = vpop.permute.xlu0 %1287
    %1289 = vrot.lane.b32.xlu0 %v357, 113
    %v1290 = vpop.permute.xlu0 %1289
    %1291 = vrot.lane.b32.xlu0 %v361, 113
    %v1292 = vpop.permute.xlu0 %1291
    %1293 = vrot.lane.b32.xlu0 %v365, 113
    %v1294 = vpop.permute.xlu0 %1293
    %1295 = vrot.lane.b32.xlu0 %v369, 113
    %v1296 = vpop.permute.xlu0 %1295
    %1297 = vrot.lane.b32.xlu0 %v373, 113
    %v1298 = vpop.permute.xlu0 %1297
    %1299 = vrot.lane.b32.xlu0 %v377, 113
    %v1300 = vpop.permute.xlu0 %1299
    %1301 = vrot.lane.b32.xlu0 %v381, 113
    %v1302 = vpop.permute.xlu0 %1301
    %1303 = vrot.lane.b32.xlu0 %v350, 113
    %v1304 = vpop.permute.xlu0 %1303
    %1305 = vrot.lane.b32.xlu0 %v354, 113
    %v1306 = vpop.permute.xlu0 %1305
    %1307 = vrot.lane.b32.xlu0 %v358, 113
    %v1308 = vpop.permute.xlu0 %1307
    %1309 = vrot.lane.b32.xlu0 %v362, 113
    %v1310 = vpop.permute.xlu0 %1309
    %1311 = vrot.lane.b32.xlu0 %v366, 113
    %v1312 = vpop.permute.xlu0 %1311
    %1313 = vrot.lane.b32.xlu0 %v370, 113
    %v1314 = vpop.permute.xlu0 %1313
    %1315 = vrot.lane.b32.xlu0 %v374, 113
    %v1316 = vpop.permute.xlu0 %1315
    %1317 = vrot.lane.b32.xlu0 %v378, 113
    %v1318 = vpop.permute.xlu0 %1317
    %1319 = vrot.lane.b32.xlu0 %v382, 113
    %v1320 = vpop.permute.xlu0 %1319
    %1321 = vrot.lane.b32.xlu0 %v351, 113
    %v1322 = vpop.permute.xlu0 %1321
    %1323 = vrot.lane.b32.xlu0 %v355, 113
    %v1324 = vpop.permute.xlu0 %1323
    %1325 = vrot.lane.b32.xlu0 %v359, 113
    %v1326 = vpop.permute.xlu0 %1325
    %1327 = vrot.lane.b32.xlu0 %v363, 113
    %v1328 = vpop.permute.xlu0 %1327
    %1329 = vrot.lane.b32.xlu0 %v367, 113
    %v1330 = vpop.permute.xlu0 %1329
    %1331 = vrot.lane.b32.xlu0 %v371, 113
    %v1332 = vpop.permute.xlu0 %1331
    %1333 = vrot.lane.b32.xlu0 %v375, 113
    %v1334 = vpop.permute.xlu0 %1333
    %1335 = vrot.lane.b32.xlu0 %v379, 113
    %v1336 = vpop.permute.xlu0 %1335
    %1337 = vrot.lane.b32.xlu0 %v383, 113
    %v1338 = vpop.permute.xlu0 %1337
    %1339 = vrot.lane.b32.xlu0 %v352, 113
    %v1340 = vpop.permute.xlu0 %1339
    %1341 = vrot.lane.b32.xlu0 %v356, 113
    %v1342 = vpop.permute.xlu0 %1341
    %1343 = vrot.lane.b32.xlu0 %v360, 113
    %v1344 = vpop.permute.xlu0 %1343
    %1345 = vrot.lane.b32.xlu0 %v364, 113
    %v1346 = vpop.permute.xlu0 %1345
    %1347 = vrot.lane.b32.xlu0 %v368, 113
    %v1348 = vpop.permute.xlu0 %1347
    %1349 = vrot.lane.b32.xlu0 %v372, 113
    %v1350 = vpop.permute.xlu0 %1349
    %1351 = vrot.lane.b32.xlu0 %v376, 113
    %v1352 = vpop.permute.xlu0 %1351
    %1353 = vrot.lane.b32.xlu0 %v380, 113
    %v1354 = vpop.permute.xlu0 %1353
    %1355 = vrot.lane.b32.xlu0 %v384, 113
    %v1356 = vpop.permute.xlu0 %1355
    %vm1357 = vcmp.lt.s32.totalorder %v458, 113
    %v1358 = vsel %vm1357, %v1322, %v1340
    %v1359 = vsel %vm1357, %v1324, %v1342
    %v1360 = vsel %vm1357, %v1326, %v1344
    %v1361 = vsel %vm1357, %v1328, %v1346
    %v1362 = vsel %vm1357, %v1330, %v1348
    %v1363 = vsel %vm1357, %v1332, %v1350
    %v1364 = vsel %vm1357, %v1334, %v1352
    %v1365 = vsel %vm1357, %v1336, %v1354
    %v1366 = vsel %vm1357, %v1338, %v1356
    %v1367 = vsel %vm1357, %v1304, %v1322
    %v1368 = vsel %vm1357, %v1306, %v1324
    %v1369 = vsel %vm1357, %v1308, %v1326
    %v1370 = vsel %vm1357, %v1310, %v1328
    %v1371 = vsel %vm1357, %v1312, %v1330
    %v1372 = vsel %vm1357, %v1314, %v1332
    %v1373 = vsel %vm1357, %v1316, %v1334
    %v1374 = vsel %vm1357, %v1318, %v1336
    %v1375 = vsel %vm1357, %v1320, %v1338
    %v1376 = vsel %vm1357, %v1286, %v1304
    %v1377 = vsel %vm1357, %v1288, %v1306
    %v1378 = vsel %vm1357, %v1290, %v1308
    %v1379 = vsel %vm1357, %v1292, %v1310
    %v1380 = vsel %vm1357, %v1294, %v1312
    %v1381 = vsel %vm1357, %v1296, %v1314
    %v1382 = vsel %vm1357, %v1298, %v1316
    %v1383 = vsel %vm1357, %v1300, %v1318
    %v1384 = vsel %vm1357, %v1302, %v1320
    %v1385 = vsel %vm1357, %v1340, %v1286
    %v1386 = vsel %vm1357, %v1342, %v1288
    %v1387 = vsel %vm1357, %v1344, %v1290
    %v1388 = vsel %vm1357, %v1346, %v1292
    %v1389 = vsel %vm1357, %v1348, %v1294
    %v1390 = vsel %vm1357, %v1350, %v1296
    %v1391 = vsel %vm1357, %v1352, %v1298
    %v1392 = vsel %vm1357, %v1354, %v1300
    %v1393 = vsel %vm1357, %v1356, %v1302
    %s1394 = scalar_lea.vmem %s6, 24
    %v1395 = vld [vmem:[%s1394] sm:$0xf]
    %v1397 = vlaneseq
    %v1398 = vshrl.u32 %v1397, 7
    %v1399 = vsub.s32 0, %v1398
    %v1400 = vrot.slane %v1395, %v1399
    %v1401 = vlaneseq
    %v1402 = vshrl.u32 %v1401, 7
    %v1403 = vsub.s32 1, %v1402
    %v1404 = vrot.slane %v1395, %v1403
    %v1405 = vlaneseq
    %v1406 = vshrl.u32 %v1405, 7
    %v1407 = vsub.s32 2, %v1406
    %v1408 = vrot.slane %v1395, %v1407
    %v1409 = vlaneseq
    %v1410 = vshrl.u32 %v1409, 7
    %v1411 = vsub.s32 3, %v1410
    %v1412 = vrot.slane %v1395, %v1411
    %v1417 = vmul.f32 %v1376, %v1400
    %v1418 = vmul.f32 %v1367, %v1404
    %v1419 = vmul.f32 %v1358, %v1408
    %v1420 = vmul.f32 %v1385, %v1412
    %v1421 = vmul.f32 %v1377, %v1400
    %v1422 = vmul.f32 %v1368, %v1404
    %v1423 = vmul.f32 %v1359, %v1408
    %v1424 = vmul.f32 %v1386, %v1412
    %v1425 = vmul.f32 %v1378, %v1400
    %v1426 = vmul.f32 %v1369, %v1404
    %v1427 = vmul.f32 %v1360, %v1408
    %v1428 = vmul.f32 %v1387, %v1412
    %v1429 = vmul.f32 %v1379, %v1400
    %v1430 = vmul.f32 %v1370, %v1404
    %v1431 = vmul.f32 %v1361, %v1408
    %v1432 = vmul.f32 %v1388, %v1412
    %v1433 = vmul.f32 %v1380, %v1400
    %v1434 = vmul.f32 %v1371, %v1404
    %v1435 = vmul.f32 %v1362, %v1408
    %v1436 = vmul.f32 %v1389, %v1412
    %v1437 = vmul.f32 %v1381, %v1400
    %v1438 = vmul.f32 %v1372, %v1404
    %v1439 = vmul.f32 %v1363, %v1408
    %v1440 = vmul.f32 %v1390, %v1412
    %v1441 = vmul.f32 %v1382, %v1400
    %v1442 = vmul.f32 %v1373, %v1404
    %v1443 = vmul.f32 %v1364, %v1408
    %v1444 = vmul.f32 %v1391, %v1412
    %v1445 = vmul.f32 %v1383, %v1400
    %v1446 = vmul.f32 %v1374, %v1404
    %v1447 = vmul.f32 %v1365, %v1408
    %v1448 = vmul.f32 %v1392, %v1412
    %v1449 = vmul.f32 %v1384, %v1400
    %v1450 = vmul.f32 %v1375, %v1404
    %v1451 = vmul.f32 %v1366, %v1408
    %v1452 = vmul.f32 %v1393, %v1412
    %1453 = vrot.lane.b32.xlu0 %v349, 112
    %v1454 = vpop.permute.xlu0 %1453
    %1455 = vrot.lane.b32.xlu0 %v353, 112
    %v1456 = vpop.permute.xlu0 %1455
    %1457 = vrot.lane.b32.xlu0 %v357, 112
    %v1458 = vpop.permute.xlu0 %1457
    %1459 = vrot.lane.b32.xlu0 %v361, 112
    %v1460 = vpop.permute.xlu0 %1459
    %1461 = vrot.lane.b32.xlu0 %v365, 112
    %v1462 = vpop.permute.xlu0 %1461
    %1463 = vrot.lane.b32.xlu0 %v369, 112
    %v1464 = vpop.permute.xlu0 %1463
    %1465 = vrot.lane.b32.xlu0 %v373, 112
    %v1466 = vpop.permute.xlu0 %1465
    %1467 = vrot.lane.b32.xlu0 %v377, 112
    %v1468 = vpop.permute.xlu0 %1467
    %1469 = vrot.lane.b32.xlu0 %v381, 112
    %v1470 = vpop.permute.xlu0 %1469
    %1471 = vrot.lane.b32.xlu0 %v350, 112
    %v1472 = vpop.permute.xlu0 %1471
    %1473 = vrot.lane.b32.xlu0 %v354, 112
    %v1474 = vpop.permute.xlu0 %1473
    %1475 = vrot.lane.b32.xlu0 %v358, 112
    %v1476 = vpop.permute.xlu0 %1475
    %1477 = vrot.lane.b32.xlu0 %v362, 112
    %v1478 = vpop.permute.xlu0 %1477
    %1479 = vrot.lane.b32.xlu0 %v366, 112
    %v1480 = vpop.permute.xlu0 %1479
    %1481 = vrot.lane.b32.xlu0 %v370, 112
    %v1482 = vpop.permute.xlu0 %1481
    %1483 = vrot.lane.b32.xlu0 %v374, 112
    %v1484 = vpop.permute.xlu0 %1483
    %1485 = vrot.lane.b32.xlu0 %v378, 112
    %v1486 = vpop.permute.xlu0 %1485
    %1487 = vrot.lane.b32.xlu0 %v382, 112
    %v1488 = vpop.permute.xlu0 %1487
    %1489 = vrot.lane.b32.xlu0 %v351, 112
    %v1490 = vpop.permute.xlu0 %1489
    %1491 = vrot.lane.b32.xlu0 %v355, 112
    %v1492 = vpop.permute.xlu0 %1491
    %1493 = vrot.lane.b32.xlu0 %v359, 112
    %v1494 = vpop.permute.xlu0 %1493
    %1495 = vrot.lane.b32.xlu0 %v363, 112
    %v1496 = vpop.permute.xlu0 %1495
    %1497 = vrot.lane.b32.xlu0 %v367, 112
    %v1498 = vpop.permute.xlu0 %1497
    %1499 = vrot.lane.b32.xlu0 %v371, 112
    %v1500 = vpop.permute.xlu0 %1499
    %1501 = vrot.lane.b32.xlu0 %v375, 112
    %v1502 = vpop.permute.xlu0 %1501
    %1503 = vrot.lane.b32.xlu0 %v379, 112
    %v1504 = vpop.permute.xlu0 %1503
    %1505 = vrot.lane.b32.xlu0 %v383, 112
    %v1506 = vpop.permute.xlu0 %1505
    %1507 = vrot.lane.b32.xlu0 %v352, 112
    %v1508 = vpop.permute.xlu0 %1507
    %1509 = vrot.lane.b32.xlu0 %v356, 112
    %v1510 = vpop.permute.xlu0 %1509
    %1511 = vrot.lane.b32.xlu0 %v360, 112
    %v1512 = vpop.permute.xlu0 %1511
    %1513 = vrot.lane.b32.xlu0 %v364, 112
    %v1514 = vpop.permute.xlu0 %1513
    %1515 = vrot.lane.b32.xlu0 %v368, 112
    %v1516 = vpop.permute.xlu0 %1515
    %1517 = vrot.lane.b32.xlu0 %v372, 112
    %v1518 = vpop.permute.xlu0 %1517
    %1519 = vrot.lane.b32.xlu0 %v376, 112
    %v1520 = vpop.permute.xlu0 %1519
    %1521 = vrot.lane.b32.xlu0 %v380, 112
    %v1522 = vpop.permute.xlu0 %1521
    %1523 = vrot.lane.b32.xlu0 %v384, 112
    %v1524 = vpop.permute.xlu0 %1523
    %vm1525 = vcmp.lt.s32.totalorder %v458, 112
    %v1526 = vsel %vm1525, %v1490, %v1508
    %v1527 = vsel %vm1525, %v1492, %v1510
    %v1528 = vsel %vm1525, %v1494, %v1512
    %v1529 = vsel %vm1525, %v1496, %v1514
    %v1530 = vsel %vm1525, %v1498, %v1516
    %v1531 = vsel %vm1525, %v1500, %v1518
    %v1532 = vsel %vm1525, %v1502, %v1520
    %v1533 = vsel %vm1525, %v1504, %v1522
    %v1534 = vsel %vm1525, %v1506, %v1524
    %v1535 = vsel %vm1525, %v1472, %v1490
    %v1536 = vsel %vm1525, %v1474, %v1492
    %v1537 = vsel %vm1525, %v1476, %v1494
    %v1538 = vsel %vm1525, %v1478, %v1496
    %v1539 = vsel %vm1525, %v1480, %v1498
    %v1540 = vsel %vm1525, %v1482, %v1500
    %v1541 = vsel %vm1525, %v1484, %v1502
    %v1542 = vsel %vm1525, %v1486, %v1504
    %v1543 = vsel %vm1525, %v1488, %v1506
    %v1544 = vsel %vm1525, %v1454, %v1472
    %v1545 = vsel %vm1525, %v1456, %v1474
    %v1546 = vsel %vm1525, %v1458, %v1476
    %v1547 = vsel %vm1525, %v1460, %v1478
    %v1548 = vsel %vm1525, %v1462, %v1480
    %v1549 = vsel %vm1525, %v1464, %v1482
    %v1550 = vsel %vm1525, %v1466, %v1484
    %v1551 = vsel %vm1525, %v1468, %v1486
    %v1552 = vsel %vm1525, %v1470, %v1488
    %v1553 = vsel %vm1525, %v1508, %v1454
    %v1554 = vsel %vm1525, %v1510, %v1456
    %v1555 = vsel %vm1525, %v1512, %v1458
    %v1556 = vsel %vm1525, %v1514, %v1460
    %v1557 = vsel %vm1525, %v1516, %v1462
    %v1558 = vsel %vm1525, %v1518, %v1464
    %v1559 = vsel %vm1525, %v1520, %v1466
    %v1560 = vsel %vm1525, %v1522, %v1468
    %v1561 = vsel %vm1525, %v1524, %v1470
    %s1562 = scalar_lea.vmem %s6, 28
    %v1563 = vld [vmem:[%s1562] sm:$0xf]
    %v1565 = vlaneseq
    %v1566 = vshrl.u32 %v1565, 7
    %v1567 = vsub.s32 0, %v1566
    %v1568 = vrot.slane %v1563, %v1567
    %v1569 = vlaneseq
    %v1570 = vshrl.u32 %v1569, 7
    %v1571 = vsub.s32 1, %v1570
    %v1572 = vrot.slane %v1563, %v1571
    %v1573 = vlaneseq
    %v1574 = vshrl.u32 %v1573, 7
    %v1575 = vsub.s32 2, %v1574
    %v1576 = vrot.slane %v1563, %v1575
    %v1577 = vlaneseq
    %v1578 = vshrl.u32 %v1577, 7
    %v1579 = vsub.s32 3, %v1578
    %v1580 = vrot.slane %v1563, %v1579
    %v1585 = vmul.f32 %v1544, %v1568
    %v1586 = vmul.f32 %v1535, %v1572
    %v1587 = vmul.f32 %v1526, %v1576
    %v1588 = vmul.f32 %v1553, %v1580
    %v1589 = vmul.f32 %v1545, %v1568
    %v1590 = vmul.f32 %v1536, %v1572
    %v1591 = vmul.f32 %v1527, %v1576
    %v1592 = vmul.f32 %v1554, %v1580
    %v1593 = vmul.f32 %v1546, %v1568
    %v1594 = vmul.f32 %v1537, %v1572
    %v1595 = vmul.f32 %v1528, %v1576
    %v1596 = vmul.f32 %v1555, %v1580
    %v1597 = vmul.f32 %v1547, %v1568
    %v1598 = vmul.f32 %v1538, %v1572
    %v1599 = vmul.f32 %v1529, %v1576
    %v1600 = vmul.f32 %v1556, %v1580
    %v1601 = vmul.f32 %v1548, %v1568
    %v1602 = vmul.f32 %v1539, %v1572
    %v1603 = vmul.f32 %v1530, %v1576
    %v1604 = vmul.f32 %v1557, %v1580
    %v1605 = vmul.f32 %v1549, %v1568
    %v1606 = vmul.f32 %v1540, %v1572
    %v1607 = vmul.f32 %v1531, %v1576
    %v1608 = vmul.f32 %v1558, %v1580
    %v1609 = vmul.f32 %v1550, %v1568
    %v1610 = vmul.f32 %v1541, %v1572
    %v1611 = vmul.f32 %v1532, %v1576
    %v1612 = vmul.f32 %v1559, %v1580
    %v1613 = vmul.f32 %v1551, %v1568
    %v1614 = vmul.f32 %v1542, %v1572
    %v1615 = vmul.f32 %v1533, %v1576
    %v1616 = vmul.f32 %v1560, %v1580
    %v1617 = vmul.f32 %v1552, %v1568
    %v1618 = vmul.f32 %v1543, %v1572
    %v1619 = vmul.f32 %v1534, %v1576
    %v1620 = vmul.f32 %v1561, %v1580
    %1621 = vrot.lane.b32.xlu0 %v349, 111
    %v1622 = vpop.permute.xlu0 %1621
    %1623 = vrot.lane.b32.xlu0 %v353, 111
    %v1624 = vpop.permute.xlu0 %1623
    %1625 = vrot.lane.b32.xlu0 %v357, 111
    %v1626 = vpop.permute.xlu0 %1625
    %1627 = vrot.lane.b32.xlu0 %v361, 111
    %v1628 = vpop.permute.xlu0 %1627
    %1629 = vrot.lane.b32.xlu0 %v365, 111
    %v1630 = vpop.permute.xlu0 %1629
    %1631 = vrot.lane.b32.xlu0 %v369, 111
    %v1632 = vpop.permute.xlu0 %1631
    %1633 = vrot.lane.b32.xlu0 %v373, 111
    %v1634 = vpop.permute.xlu0 %1633
    %1635 = vrot.lane.b32.xlu0 %v377, 111
    %v1636 = vpop.permute.xlu0 %1635
    %1637 = vrot.lane.b32.xlu0 %v381, 111
    %v1638 = vpop.permute.xlu0 %1637
    %1639 = vrot.lane.b32.xlu0 %v350, 111
    %v1640 = vpop.permute.xlu0 %1639
    %1641 = vrot.lane.b32.xlu0 %v354, 111
    %v1642 = vpop.permute.xlu0 %1641
    %1643 = vrot.lane.b32.xlu0 %v358, 111
    %v1644 = vpop.permute.xlu0 %1643
    %1645 = vrot.lane.b32.xlu0 %v362, 111
    %v1646 = vpop.permute.xlu0 %1645
    %1647 = vrot.lane.b32.xlu0 %v366, 111
    %v1648 = vpop.permute.xlu0 %1647
    %1649 = vrot.lane.b32.xlu0 %v370, 111
    %v1650 = vpop.permute.xlu0 %1649
    %1651 = vrot.lane.b32.xlu0 %v374, 111
    %v1652 = vpop.permute.xlu0 %1651
    %1653 = vrot.lane.b32.xlu0 %v378, 111
    %v1654 = vpop.permute.xlu0 %1653
    %1655 = vrot.lane.b32.xlu0 %v382, 111
    %v1656 = vpop.permute.xlu0 %1655
    %1657 = vrot.lane.b32.xlu0 %v351, 111
    %v1658 = vpop.permute.xlu0 %1657
    %1659 = vrot.lane.b32.xlu0 %v355, 111
    %v1660 = vpop.permute.xlu0 %1659
    %1661 = vrot.lane.b32.xlu0 %v359, 111
    %v1662 = vpop.permute.xlu0 %1661
    %1663 = vrot.lane.b32.xlu0 %v363, 111
    %v1664 = vpop.permute.xlu0 %1663
    %1665 = vrot.lane.b32.xlu0 %v367, 111
    %v1666 = vpop.permute.xlu0 %1665
    %1667 = vrot.lane.b32.xlu0 %v371, 111
    %v1668 = vpop.permute.xlu0 %1667
    %1669 = vrot.lane.b32.xlu0 %v375, 111
    %v1670 = vpop.permute.xlu0 %1669
    %1671 = vrot.lane.b32.xlu0 %v379, 111
    %v1672 = vpop.permute.xlu0 %1671
    %1673 = vrot.lane.b32.xlu0 %v383, 111
    %v1674 = vpop.permute.xlu0 %1673
    %1675 = vrot.lane.b32.xlu0 %v352, 111
    %v1676 = vpop.permute.xlu0 %1675
    %1677 = vrot.lane.b32.xlu0 %v356, 111
    %v1678 = vpop.permute.xlu0 %1677
    %1679 = vrot.lane.b32.xlu0 %v360, 111
    %v1680 = vpop.permute.xlu0 %1679
    %1681 = vrot.lane.b32.xlu0 %v364, 111
    %v1682 = vpop.permute.xlu0 %1681
    %1683 = vrot.lane.b32.xlu0 %v368, 111
    %v1684 = vpop.permute.xlu0 %1683
    %1685 = vrot.lane.b32.xlu0 %v372, 111
    %v1686 = vpop.permute.xlu0 %1685
    %1687 = vrot.lane.b32.xlu0 %v376, 111
    %v1688 = vpop.permute.xlu0 %1687
    %1689 = vrot.lane.b32.xlu0 %v380, 111
    %v1690 = vpop.permute.xlu0 %1689
    %1691 = vrot.lane.b32.xlu0 %v384, 111
    %v1692 = vpop.permute.xlu0 %1691
    %vm1693 = vcmp.lt.s32.totalorder %v458, 111
    %v1694 = vsel %vm1693, %v1658, %v1676
    %v1695 = vsel %vm1693, %v1660, %v1678
    %v1696 = vsel %vm1693, %v1662, %v1680
    %v1697 = vsel %vm1693, %v1664, %v1682
    %v1698 = vsel %vm1693, %v1666, %v1684
    %v1699 = vsel %vm1693, %v1668, %v1686
    %v1700 = vsel %vm1693, %v1670, %v1688
    %v1701 = vsel %vm1693, %v1672, %v1690
    %v1702 = vsel %vm1693, %v1674, %v1692
    %v1703 = vsel %vm1693, %v1640, %v1658
    %v1704 = vsel %vm1693, %v1642, %v1660
    %v1705 = vsel %vm1693, %v1644, %v1662
    %v1706 = vsel %vm1693, %v1646, %v1664
    %v1707 = vsel %vm1693, %v1648, %v1666
    %v1708 = vsel %vm1693, %v1650, %v1668
    %v1709 = vsel %vm1693, %v1652, %v1670
    %v1710 = vsel %vm1693, %v1654, %v1672
    %v1711 = vsel %vm1693, %v1656, %v1674
    %v1712 = vsel %vm1693, %v1622, %v1640
    %v1713 = vsel %vm1693, %v1624, %v1642
    %v1714 = vsel %vm1693, %v1626, %v1644
    %v1715 = vsel %vm1693, %v1628, %v1646
    %v1716 = vsel %vm1693, %v1630, %v1648
    %v1717 = vsel %vm1693, %v1632, %v1650
    %v1718 = vsel %vm1693, %v1634, %v1652
    %v1719 = vsel %vm1693, %v1636, %v1654
    %v1720 = vsel %vm1693, %v1638, %v1656
    %v1721 = vsel %vm1693, %v1676, %v1622
    %v1722 = vsel %vm1693, %v1678, %v1624
    %v1723 = vsel %vm1693, %v1680, %v1626
    %v1724 = vsel %vm1693, %v1682, %v1628
    %v1725 = vsel %vm1693, %v1684, %v1630
    %v1726 = vsel %vm1693, %v1686, %v1632
    %v1727 = vsel %vm1693, %v1688, %v1634
    %v1728 = vsel %vm1693, %v1690, %v1636
    %v1729 = vsel %vm1693, %v1692, %v1638
    %s1730 = scalar_lea.vmem %s6, 32
    %v1731 = vld [vmem:[%s1730] sm:$0xf]
    %v1733 = vlaneseq
    %v1734 = vshrl.u32 %v1733, 7
    %v1735 = vsub.s32 0, %v1734
    %v1736 = vrot.slane %v1731, %v1735
    %v1737 = vlaneseq
    %v1738 = vshrl.u32 %v1737, 7
    %v1739 = vsub.s32 1, %v1738
    %v1740 = vrot.slane %v1731, %v1739
    %v1741 = vlaneseq
    %v1742 = vshrl.u32 %v1741, 7
    %v1743 = vsub.s32 2, %v1742
    %v1744 = vrot.slane %v1731, %v1743
    %v1745 = vlaneseq
    %v1746 = vshrl.u32 %v1745, 7
    %v1747 = vsub.s32 3, %v1746
    %v1748 = vrot.slane %v1731, %v1747
    %v1753 = vmul.f32 %v1712, %v1736
    %v1754 = vmul.f32 %v1703, %v1740
    %v1755 = vmul.f32 %v1694, %v1744
    %v1756 = vmul.f32 %v1721, %v1748
    %v1757 = vmul.f32 %v1713, %v1736
    %v1758 = vmul.f32 %v1704, %v1740
    %v1759 = vmul.f32 %v1695, %v1744
    %v1760 = vmul.f32 %v1722, %v1748
    %v1761 = vmul.f32 %v1714, %v1736
    %v1762 = vmul.f32 %v1705, %v1740
    %v1763 = vmul.f32 %v1696, %v1744
    %v1764 = vmul.f32 %v1723, %v1748
    %v1765 = vmul.f32 %v1715, %v1736
    %v1766 = vmul.f32 %v1706, %v1740
    %v1767 = vmul.f32 %v1697, %v1744
    %v1768 = vmul.f32 %v1724, %v1748
    %v1769 = vmul.f32 %v1716, %v1736
    %v1770 = vmul.f32 %v1707, %v1740
    %v1771 = vmul.f32 %v1698, %v1744
    %v1772 = vmul.f32 %v1725, %v1748
    %v1773 = vmul.f32 %v1717, %v1736
    %v1774 = vmul.f32 %v1708, %v1740
    %v1775 = vmul.f32 %v1699, %v1744
    %v1776 = vmul.f32 %v1726, %v1748
    %v1777 = vmul.f32 %v1718, %v1736
    %v1778 = vmul.f32 %v1709, %v1740
    %v1779 = vmul.f32 %v1700, %v1744
    %v1780 = vmul.f32 %v1727, %v1748
    %v1781 = vmul.f32 %v1719, %v1736
    %v1782 = vmul.f32 %v1710, %v1740
    %v1783 = vmul.f32 %v1701, %v1744
    %v1784 = vmul.f32 %v1728, %v1748
    %v1785 = vmul.f32 %v1720, %v1736
    %v1786 = vmul.f32 %v1711, %v1740
    %v1787 = vmul.f32 %v1702, %v1744
    %v1788 = vmul.f32 %v1729, %v1748
    %v1789 = vld [vmem:[%s5] sm:$0xff]
    %v1790 = vld [vmem:[%s5 + $0x8] sm:$0xff]
    %v1791 = vld [vmem:[%s5 + $0x10] sm:$0xff]
    %v1792 = vld [vmem:[%s5 + $0x18] sm:$0xff]
    %v1793 = vld [vmem:[%s5 + $0x20] sm:$0xff]
    %v1794 = vld [vmem:[%s5 + $0x28] sm:$0xff]
    %v1795 = vld [vmem:[%s5 + $0x30] sm:$0xff]
    %v1796 = vld [vmem:[%s5 + $0x38] sm:$0xff]
    %v1797 = vld [vmem:[%s5 + $0x40] sm:$0xff]
    %v1798 = vpack.c.bf16 %v522, %v518
    %v1799 = vpack.c.bf16 %v523, %v519
    %v1800 = vpack.c.bf16 %v524, %v520
    %v1801 = vpack.c.bf16 %v525, %v521
    %v1802 = vpack.c.bf16 %v530, %v526
    %v1803 = vpack.c.bf16 %v531, %v527
    %v1804 = vpack.c.bf16 %v532, %v528
    %v1805 = vpack.c.bf16 %v533, %v529
    %v1806 = vpack.c.bf16 %v538, %v534
    %v1807 = vpack.c.bf16 %v539, %v535
    %v1808 = vpack.c.bf16 %v540, %v536
    %v1809 = vpack.c.bf16 %v541, %v537
    %v1810 = vpack.c.bf16 %v546, %v542
    %v1811 = vpack.c.bf16 %v547, %v543
    %v1812 = vpack.c.bf16 %v548, %v544
    %v1813 = vpack.c.bf16 %v549, %v545
    %v1814 = vpack.c.bf16 %v686, %v550
    %v1815 = vpack.c.bf16 %v687, %v551
    %v1816 = vpack.c.bf16 %v688, %v552
    %v1817 = vpack.c.bf16 %v689, %v553
    %v1818 = vpack.c.bf16 %v694, %v690
    %v1819 = vpack.c.bf16 %v695, %v691
    %v1820 = vpack.c.bf16 %v696, %v692
    %v1821 = vpack.c.bf16 %v697, %v693
    %v1822 = vpack.c.bf16 %v702, %v698
    %v1823 = vpack.c.bf16 %v703, %v699
    %v1824 = vpack.c.bf16 %v704, %v700
    %v1825 = vpack.c.bf16 %v705, %v701
    %v1826 = vpack.c.bf16 %v710, %v706
    %v1827 = vpack.c.bf16 %v711, %v707
    %v1828 = vpack.c.bf16 %v712, %v708
    %v1829 = vpack.c.bf16 %v713, %v709
    %v1830 = vpack.c.bf16 %v718, %v714
    %v1831 = vpack.c.bf16 %v719, %v715
    %v1832 = vpack.c.bf16 %v720, %v716
    %v1833 = vpack.c.bf16 %v721, %v717
    %v1834 = vpack.c.bf16 %v858, %v854
    %v1835 = vpack.c.bf16 %v859, %v855
    %v1836 = vpack.c.bf16 %v860, %v856
    %v1837 = vpack.c.bf16 %v861, %v857
    %v1838 = vpack.c.bf16 %v866, %v862
    %v1839 = vpack.c.bf16 %v867, %v863
    %v1840 = vpack.c.bf16 %v868, %v864
    %v1841 = vpack.c.bf16 %v869, %v865
    %v1842 = vpack.c.bf16 %v874, %v870
    %v1843 = vpack.c.bf16 %v875, %v871
    %v1844 = vpack.c.bf16 %v876, %v872
    %v1845 = vpack.c.bf16 %v877, %v873
    %v1846 = vpack.c.bf16 %v882, %v878
    %v1847 = vpack.c.bf16 %v883, %v879
    %v1848 = vpack.c.bf16 %v884, %v880
    %v1849 = vpack.c.bf16 %v885, %v881
    %v1850 = vpack.c.bf16 %v1022, %v886
    %v1851 = vpack.c.bf16 %v1023, %v887
    %v1852 = vpack.c.bf16 %v1024, %v888
    %v1853 = vpack.c.bf16 %v1025, %v889
    %v1854 = vpack.c.bf16 %v1030, %v1026
    %v1855 = vpack.c.bf16 %v1031, %v1027
    %v1856 = vpack.c.bf16 %v1032, %v1028
    %v1857 = vpack.c.bf16 %v1033, %v1029
    %v1858 = vpack.c.bf16 %v1038, %v1034
    %v1859 = vpack.c.bf16 %v1039, %v1035
    %v1860 = vpack.c.bf16 %v1040, %v1036
    %v1861 = vpack.c.bf16 %v1041, %v1037
    %v1862 = vpack.c.bf16 %v1046, %v1042
    %v1863 = vpack.c.bf16 %v1047, %v1043
    %v1864 = vpack.c.bf16 %v1048, %v1044
    %v1865 = vpack.c.bf16 %v1049, %v1045
    %v1866 = vpack.c.bf16 %v1054, %v1050
    %v1867 = vpack.c.bf16 %v1055, %v1051
    %v1868 = vpack.c.bf16 %v1056, %v1052
    %v1869 = vpack.c.bf16 %v1057, %v1053
    %v1870 = vpack.c.bf16 %v1085, %v1081
    %v1871 = vpack.c.bf16 %v1086, %v1082
    %v1872 = vpack.c.bf16 %v1087, %v1083
    %v1873 = vpack.c.bf16 %v1088, %v1084
    %v1874 = vpack.c.bf16 %v1093, %v1089
    %v1875 = vpack.c.bf16 %v1094, %v1090
    %v1876 = vpack.c.bf16 %v1095, %v1091
    %v1877 = vpack.c.bf16 %v1096, %v1092
    %v1878 = vpack.c.bf16 %v1101, %v1097
    %v1879 = vpack.c.bf16 %v1102, %v1098
    %v1880 = vpack.c.bf16 %v1103, %v1099
    %v1881 = vpack.c.bf16 %v1104, %v1100
    %v1882 = vpack.c.bf16 %v1109, %v1105
    %v1883 = vpack.c.bf16 %v1110, %v1106
    %v1884 = vpack.c.bf16 %v1111, %v1107
    %v1885 = vpack.c.bf16 %v1112, %v1108
    %v1886 = vpack.c.bf16 %v1249, %v1113
    %v1887 = vpack.c.bf16 %v1250, %v1114
    %v1888 = vpack.c.bf16 %v1251, %v1115
    %v1889 = vpack.c.bf16 %v1252, %v1116
    %v1890 = vpack.c.bf16 %v1257, %v1253
    %v1891 = vpack.c.bf16 %v1258, %v1254
    %v1892 = vpack.c.bf16 %v1259, %v1255
    %v1893 = vpack.c.bf16 %v1260, %v1256
    %v1894 = vpack.c.bf16 %v1265, %v1261
    %v1895 = vpack.c.bf16 %v1266, %v1262
    %v1896 = vpack.c.bf16 %v1267, %v1263
    %v1897 = vpack.c.bf16 %v1268, %v1264
    %v1898 = vpack.c.bf16 %v1273, %v1269
    %v1899 = vpack.c.bf16 %v1274, %v1270
    %v1900 = vpack.c.bf16 %v1275, %v1271
    %v1901 = vpack.c.bf16 %v1276, %v1272
    %v1902 = vpack.c.bf16 %v1281, %v1277
    %v1903 = vpack.c.bf16 %v1282, %v1278
    %v1904 = vpack.c.bf16 %v1283, %v1279
    %v1905 = vpack.c.bf16 %v1284, %v1280
    %v1906 = vpack.c.bf16 %v1421, %v1417
    %v1907 = vpack.c.bf16 %v1422, %v1418
    %v1908 = vpack.c.bf16 %v1423, %v1419
    %v1909 = vpack.c.bf16 %v1424, %v1420
    %v1910 = vpack.c.bf16 %v1429, %v1425
    %v1911 = vpack.c.bf16 %v1430, %v1426
    %v1912 = vpack.c.bf16 %v1431, %v1427
    %v1913 = vpack.c.bf16 %v1432, %v1428
    %v1914 = vpack.c.bf16 %v1437, %v1433
    %v1915 = vpack.c.bf16 %v1438, %v1434
    %v1916 = vpack.c.bf16 %v1439, %v1435
    %v1917 = vpack.c.bf16 %v1440, %v1436
    %v1918 = vpack.c.bf16 %v1445, %v1441
    %v1919 = vpack.c.bf16 %v1446, %v1442
    %v1920 = vpack.c.bf16 %v1447, %v1443
    %v1921 = vpack.c.bf16 %v1448, %v1444
    %v1922 = vpack.c.bf16 %v1585, %v1449
    %v1923 = vpack.c.bf16 %v1586, %v1450
    %v1924 = vpack.c.bf16 %v1587, %v1451
    %v1925 = vpack.c.bf16 %v1588, %v1452
    %v1926 = vpack.c.bf16 %v1593, %v1589
    %v1927 = vpack.c.bf16 %v1594, %v1590
    %v1928 = vpack.c.bf16 %v1595, %v1591
    %v1929 = vpack.c.bf16 %v1596, %v1592
    %v1930 = vpack.c.bf16 %v1601, %v1597
    %v1931 = vpack.c.bf16 %v1602, %v1598
    %v1932 = vpack.c.bf16 %v1603, %v1599
    %v1933 = vpack.c.bf16 %v1604, %v1600
    %v1934 = vpack.c.bf16 %v1609, %v1605
    %v1935 = vpack.c.bf16 %v1610, %v1606
    %v1936 = vpack.c.bf16 %v1611, %v1607
    %v1937 = vpack.c.bf16 %v1612, %v1608
    %v1938 = vpack.c.bf16 %v1617, %v1613
    %v1939 = vpack.c.bf16 %v1618, %v1614
    %v1940 = vpack.c.bf16 %v1619, %v1615
    %v1941 = vpack.c.bf16 %v1620, %v1616
    %v1942 = vpack.c.bf16 %v1757, %v1753
    %v1943 = vpack.c.bf16 %v1758, %v1754
    %v1944 = vpack.c.bf16 %v1759, %v1755
    %v1945 = vpack.c.bf16 %v1760, %v1756
    %v1946 = vpack.c.bf16 %v1765, %v1761
    %v1947 = vpack.c.bf16 %v1766, %v1762
    %v1948 = vpack.c.bf16 %v1767, %v1763
    %v1949 = vpack.c.bf16 %v1768, %v1764
    %v1950 = vpack.c.bf16 %v1773, %v1769
    %v1951 = vpack.c.bf16 %v1774, %v1770
    %v1952 = vpack.c.bf16 %v1775, %v1771
    %v1953 = vpack.c.bf16 %v1776, %v1772
    %v1954 = vpack.c.bf16 %v1781, %v1777
    %v1955 = vpack.c.bf16 %v1782, %v1778
    %v1956 = vpack.c.bf16 %v1783, %v1779
    %v1957 = vpack.c.bf16 %v1784, %v1780
    %v1958 = vpack.c.bf16 %v1785, %v1785
    %v1959 = vpack.c.bf16 %v1786, %v1786
    %v1960 = vpack.c.bf16 %v1787, %v1787
    %v1961 = vpack.c.bf16 %v1788, %v1788
    %v1971 = vunpack.c.l.b16 %v1789
    %v1972 = vunpack.c.h.b16 %v1789
    %v1973 = vunpack.c.l.b16 %v1790
    %v1974 = vunpack.c.h.b16 %v1790
    %v1975 = vunpack.c.l.b16 %v1791
    %v1976 = vunpack.c.h.b16 %v1791
    %v1977 = vunpack.c.l.b16 %v1792
    %v1978 = vunpack.c.h.b16 %v1792
    %v1979 = vunpack.c.l.b16 %v1793
    %v1980 = vunpack.c.h.b16 %v1793
    %v1981 = vunpack.c.l.b16 %v1794
    %v1982 = vunpack.c.h.b16 %v1794
    %v1983 = vunpack.c.l.b16 %v1795
    %v1984 = vunpack.c.h.b16 %v1795
    %v1985 = vunpack.c.l.b16 %v1796
    %v1986 = vunpack.c.h.b16 %v1796
    %v1987 = vunpack.c.l.b16 %v1797
    %v1988 = vunpack.c.h.b16 %v1797
    %v1989 = vpack.c.b16 %v1977, %v1971
    %v1990 = vpack.c.b16 %v1978, %v1972
    %v1991 = vpack.c.b16 %v1979, %v1973
    %v1992 = vpack.c.b16 %v1980, %v1974
    %v1993 = vpack.c.b16 %v1981, %v1975
    %v1994 = vpack.c.b16 %v1982, %v1976
    %v1995 = vpack.c.b16 %v1983, %v1983
    %v1996 = vpack.c.b16 %v1984, %v1984
    %v1997 = vpack.c.b16 %v1985, %v1985
    %v1998 = vpack.c.b16 %v1986, %v1986
    %v1999 = vpack.c.b16 %v1987, %v1987
    %v2000 = vpack.c.b16 %v1988, %v1988
    %vm2011 = vcmask 64512
    %v2013 = vsel %vm2011, %v1994, 0
    %v2016 = vsel %vm2011, %v2000, 0
    %vm2018 = vcmask 1043456
    %v2020 = vsel %vm2018, %v1958, 0
    %v2023 = vsel %vm2018, %v1959, 0
    %v2026 = vsel %vm2018, %v1960, 0
    %v2029 = vsel %vm2018, %v1961, 0
    %2031 = vmatprep.subr.bf16.mxu0 %v1827
    %2032 = vmatpush1.bf16.msra.mxu0 %v1826
    %2033 = vmatprep.subr.bf16.mxu0 %v1823
    %2034 = vmatpush1.bf16.msra.mxu0 %v1822
    %2035 = vmatprep.subr.bf16.mxu0 %v1819
    %2036 = vmatpush1.bf16.msra.mxu0 %v1818
    %2037 = vmatprep.subr.bf16.mxu0 %v1815
    %2038 = vmatpush1.bf16.msra.mxu0 %v1814
    %2039 = vmatprep.subr.bf16.mxu0 %v1811
    %2040 = vmatpush1.bf16.msra.mxu0 %v1810
    %2041 = vmatprep.subr.bf16.mxu0 %v1807
    %2042 = vmatpush1.bf16.msra.mxu0 %v1806
    %2043 = vmatprep.subr.bf16.mxu0 %v1803
    %2044 = vmatpush1.bf16.msra.mxu0 %v1802
    %2045 = vmatprep.subr.bf16.mxu0 %v1799
    %2046 = vmatpush1.bf16.msra.mxu0 %v1798
    %2047 = vmatprep.subr.bf16.mxu0 %v1859
    %2048 = vmatpush2.bf16.msra.mxu0 %v1858
    %2049 = vmatprep.subr.bf16.mxu0 %v1855
    %2050 = vmatpush2.bf16.msra.mxu0 %v1854
    %2051 = vmatprep.subr.bf16.mxu0 %v1851
    %2052 = vmatpush2.bf16.msra.mxu0 %v1850
    %2053 = vmatprep.subr.bf16.mxu0 %v1847
    %2054 = vmatpush2.bf16.msra.mxu0 %v1846
    %2055 = vmatprep.subr.bf16.mxu0 %v1843
    %2056 = vmatpush2.bf16.msra.mxu0 %v1842
    %2057 = vmatprep.subr.bf16.mxu0 %v1839
    %2058 = vmatpush2.bf16.msra.mxu0 %v1838
    %2059 = vmatprep.subr.bf16.mxu0 %v1835
    %2060 = vmatpush2.bf16.msra.mxu0 %v1834
    %2061 = vmatprep.subr.bf16.mxu0 %v1831
    %2062 = vmatpush2.bf16.msra.mxu0 %v1830
    %2063 = vmatprep.mubr.bf16.mxu0 %v1990
    %2064 = vmatmul.mubr.bf16.gmra.mxu0 %v1989
    %v2065 = vpop.f32.mrf.mxu0
    %v2066 = vadd.f32 0.0, %v2065
    %v2067 = vpop.f32.mrf.mxu0
    %v2068 = vadd.f32 0.0, %v2067
    %v2069 = vpop.f32.mrf.mxu0
    %v2070 = vadd.f32 0.0, %v2069
    %v2071 = vpop.f32.mrf.mxu0
    %v2072 = vadd.f32 0.0, %v2071
    %2073 = vmatprep.mubr.bf16.mxu0 %v1996
    %2074 = vmatmul.mubr.bf16.gmra.mxu0 %v1995
    %v2075 = vpop.f32.mrf.mxu0
    %v2076 = vadd.f32 0.0, %v2075
    %v2077 = vpop.f32.mrf.mxu0
    %v2078 = vadd.f32 0.0, %v2077
    %v2079 = vpop.f32.mrf.mxu0
    %v2080 = vpop.f32.mrf.mxu0
    %2081 = vdwg.mxu0
    %2082 = vmatprep.subr.bf16.mxu0 %v1891
    %2083 = vmatpush1.bf16.msra.mxu0 %v1890
    %2084 = vmatprep.subr.bf16.mxu0 %v1887
    %2085 = vmatpush1.bf16.msra.mxu0 %v1886
    %2086 = vmatprep.subr.bf16.mxu0 %v1883
    %2087 = vmatpush1.bf16.msra.mxu0 %v1882
    %2088 = vmatprep.subr.bf16.mxu0 %v1879
    %2089 = vmatpush1.bf16.msra.mxu0 %v1878
    %2090 = vmatprep.subr.bf16.mxu0 %v1875
    %2091 = vmatpush1.bf16.msra.mxu0 %v1874
    %2092 = vmatprep.subr.bf16.mxu0 %v1871
    %2093 = vmatpush1.bf16.msra.mxu0 %v1870
    %2094 = vmatprep.subr.bf16.mxu0 %v1867
    %2095 = vmatpush1.bf16.msra.mxu0 %v1866
    %2096 = vmatprep.subr.bf16.mxu0 %v1863
    %2097 = vmatpush1.bf16.msra.mxu0 %v1862
    %2098 = vmatprep.subr.bf16.mxu0 %v1923
    %2099 = vmatpush2.bf16.msra.mxu0 %v1922
    %2100 = vmatprep.subr.bf16.mxu0 %v1919
    %2101 = vmatpush2.bf16.msra.mxu0 %v1918
    %2102 = vmatprep.subr.bf16.mxu0 %v1915
    %2103 = vmatpush2.bf16.msra.mxu0 %v1914
    %2104 = vmatprep.subr.bf16.mxu0 %v1911
    %2105 = vmatpush2.bf16.msra.mxu0 %v1910
    %2106 = vmatprep.subr.bf16.mxu0 %v1907
    %2107 = vmatpush2.bf16.msra.mxu0 %v1906
    %2108 = vmatprep.subr.bf16.mxu0 %v1903
    %2109 = vmatpush2.bf16.msra.mxu0 %v1902
    %2110 = vmatprep.subr.bf16.mxu0 %v1899
    %2111 = vmatpush2.bf16.msra.mxu0 %v1898
    %2112 = vmatprep.subr.bf16.mxu0 %v1895
    %2113 = vmatpush2.bf16.msra.mxu0 %v1894
    %2114 = vmatprep.mubr.bf16.mxu0 %v1992
    %2115 = vmatmul.mubr.bf16.gmra.mxu0 %v1991
    %v2116 = vpop.f32.mrf.mxu0
    %v2117 = vadd.f32 %v2066, %v2116
    %v2118 = vpop.f32.mrf.mxu0
    %v2119 = vadd.f32 %v2068, %v2118
    %v2120 = vpop.f32.mrf.mxu0
    %v2121 = vadd.f32 %v2070, %v2120
    %v2122 = vpop.f32.mrf.mxu0
    %v2123 = vadd.f32 %v2072, %v2122
    %2124 = vmatprep.mubr.bf16.mxu0 %v1998
    %2125 = vmatmul.mubr.bf16.gmra.mxu0 %v1997
    %v2126 = vpop.f32.mrf.mxu0
    %v2127 = vadd.f32 %v2076, %v2126
    %v2128 = vpop.f32.mrf.mxu0
    %v2129 = vadd.f32 %v2078, %v2128
    %v2130 = vpop.f32.mrf.mxu0
    %v2131 = vpop.f32.mrf.mxu0
    %2132 = vdwg.mxu0
    %2133 = vmatprep.subr.bf16.mxu0 %v1955
    %2134 = vmatpush1.bf16.msra.mxu0 %v1954
    %2135 = vmatprep.subr.bf16.mxu0 %v1951
    %2136 = vmatpush1.bf16.msra.mxu0 %v1950
    %2137 = vmatprep.subr.bf16.mxu0 %v1947
    %2138 = vmatpush1.bf16.msra.mxu0 %v1946
    %2139 = vmatprep.subr.bf16.mxu0 %v1943
    %2140 = vmatpush1.bf16.msra.mxu0 %v1942
    %2141 = vmatprep.subr.bf16.mxu0 %v1939
    %2142 = vmatpush1.bf16.msra.mxu0 %v1938
    %2143 = vmatprep.subr.bf16.mxu0 %v1935
    %2144 = vmatpush1.bf16.msra.mxu0 %v1934
    %2145 = vmatprep.subr.bf16.mxu0 %v1931
    %2146 = vmatpush1.bf16.msra.mxu0 %v1930
    %2147 = vmatprep.subr.bf16.mxu0 %v1927
    %2148 = vmatpush1.bf16.msra.mxu0 %v1926
    %2149 = vmatprep.subr.bf16.mxu0 0
    %2150 = vmatpush2.bf16.msra.mxu0 0
    %2151 = vmatprep.subr.bf16.mxu0 0
    %2152 = vmatpush2.bf16.msra.mxu0 0
    %2153 = vmatprep.subr.bf16.mxu0 0
    %2154 = vmatpush2.bf16.msra.mxu0 0
    %2155 = vmatprep.subr.bf16.mxu0 0
    %2156 = vmatpush2.bf16.msra.mxu0 0
    %2157 = vmatprep.subr.bf16.mxu0 0
    %2158 = vmatpush2.bf16.msra.mxu0 0
    %2159 = vmatprep.subr.bf16.mxu0 0
    %2160 = vmatpush2.bf16.msra.mxu0 0
    %2161 = vmatprep.subr.bf16.mxu0 0
    %2162 = vmatpush2.bf16.msra.mxu0 0
    %2163 = vmatprep.subr.bf16.mxu0 %v2023
    %2164 = vmatpush2.bf16.msra.mxu0 %v2020
    %2165 = vmatprep.mubr.bf16.mxu0 %v2013
    %2166 = vmatmul.mubr.bf16.gmra.mxu0 %v1993
    %v2167 = vpop.f32.mrf.mxu0
    %v2168 = vadd.f32 %v2117, %v2167
    %v2169 = vpop.f32.mrf.mxu0
    %v2170 = vadd.f32 %v2119, %v2169
    %v2171 = vpop.f32.mrf.mxu0
    %v2172 = vadd.f32 %v2121, %v2171
    %v2173 = vpop.f32.mrf.mxu0
    %v2174 = vadd.f32 %v2123, %v2173
    %2175 = vmatprep.mubr.bf16.mxu0 %v2016
    %2176 = vmatmul.mubr.bf16.gmra.mxu0 %v1999
    %v2177 = vpop.f32.mrf.mxu0
    %v2178 = vadd.f32 %v2127, %v2177
    %v2179 = vpop.f32.mrf.mxu0
    %v2180 = vadd.f32 %v2129, %v2179
    %v2181 = vpop.f32.mrf.mxu0
    %v2182 = vpop.f32.mrf.mxu0
    %2183 = vdwg.mxu0
    %2184 = vmatprep.subr.bf16.mxu0 %v1829
    %2185 = vmatpush1.bf16.msra.mxu0 %v1828
    %2186 = vmatprep.subr.bf16.mxu0 %v1825
    %2187 = vmatpush1.bf16.msra.mxu0 %v1824
    %2188 = vmatprep.subr.bf16.mxu0 %v1821
    %2189 = vmatpush1.bf16.msra.mxu0 %v1820
    %2190 = vmatprep.subr.bf16.mxu0 %v1817
    %2191 = vmatpush1.bf16.msra.mxu0 %v1816
    %2192 = vmatprep.subr.bf16.mxu0 %v1813
    %2193 = vmatpush1.bf16.msra.mxu0 %v1812
    %2194 = vmatprep.subr.bf16.mxu0 %v1809
    %2195 = vmatpush1.bf16.msra.mxu0 %v1808
    %2196 = vmatprep.subr.bf16.mxu0 %v1805
    %2197 = vmatpush1.bf16.msra.mxu0 %v1804
    %2198 = vmatprep.subr.bf16.mxu0 %v1801
    %2199 = vmatpush1.bf16.msra.mxu0 %v1800
    %2200 = vmatprep.subr.bf16.mxu0 %v1861
    %2201 = vmatpush2.bf16.msra.mxu0 %v1860
    %2202 = vmatprep.subr.bf16.mxu0 %v1857
    %2203 = vmatpush2.bf16.msra.mxu0 %v1856
    %2204 = vmatprep.subr.bf16.mxu0 %v1853
    %2205 = vmatpush2.bf16.msra.mxu0 %v1852
    %2206 = vmatprep.subr.bf16.mxu0 %v1849
    %2207 = vmatpush2.bf16.msra.mxu0 %v1848
    %2208 = vmatprep.subr.bf16.mxu0 %v1845
    %2209 = vmatpush2.bf16.msra.mxu0 %v1844
    %2210 = vmatprep.subr.bf16.mxu0 %v1841
    %2211 = vmatpush2.bf16.msra.mxu0 %v1840
    %2212 = vmatprep.subr.bf16.mxu0 %v1837
    %2213 = vmatpush2.bf16.msra.mxu0 %v1836
    %2214 = vmatprep.subr.bf16.mxu0 %v1833
    %2215 = vmatpush2.bf16.msra.mxu0 %v1832
    %2216 = vmatprep.mubr.bf16.mxu0 %v1990
    %2217 = vmatmul.mubr.bf16.gmra.mxu0 %v1989
    %v2218 = vpop.f32.mrf.mxu0
    %v2219 = vadd.f32 0.0, %v2218
    %v2220 = vpop.f32.mrf.mxu0
    %v2221 = vadd.f32 0.0, %v2220
    %v2222 = vpop.f32.mrf.mxu0
    %v2223 = vadd.f32 0.0, %v2222
    %v2224 = vpop.f32.mrf.mxu0
    %v2225 = vadd.f32 0.0, %v2224
    %2226 = vmatprep.mubr.bf16.mxu0 %v1996
    %2227 = vmatmul.mubr.bf16.gmra.mxu0 %v1995
    %v2228 = vpop.f32.mrf.mxu0
    %v2229 = vadd.f32 0.0, %v2228
    %v2230 = vpop.f32.mrf.mxu0
    %v2231 = vadd.f32 0.0, %v2230
    %v2232 = vpop.f32.mrf.mxu0
    %v2233 = vpop.f32.mrf.mxu0
    %2234 = vdwg.mxu0
    %2235 = vmatprep.subr.bf16.mxu0 %v1893
    %2236 = vmatpush1.bf16.msra.mxu0 %v1892
    %2237 = vmatprep.subr.bf16.mxu0 %v1889
    %2238 = vmatpush1.bf16.msra.mxu0 %v1888
    %2239 = vmatprep.subr.bf16.mxu0 %v1885
    %2240 = vmatpush1.bf16.msra.mxu0 %v1884
    %2241 = vmatprep.subr.bf16.mxu0 %v1881
    %2242 = vmatpush1.bf16.msra.mxu0 %v1880
    %2243 = vmatprep.subr.bf16.mxu0 %v1877
    %2244 = vmatpush1.bf16.msra.mxu0 %v1876
    %2245 = vmatprep.subr.bf16.mxu0 %v1873
    %2246 = vmatpush1.bf16.msra.mxu0 %v1872
    %2247 = vmatprep.subr.bf16.mxu0 %v1869
    %2248 = vmatpush1.bf16.msra.mxu0 %v1868
    %2249 = vmatprep.subr.bf16.mxu0 %v1865
    %2250 = vmatpush1.bf16.msra.mxu0 %v1864
    %2251 = vmatprep.subr.bf16.mxu0 %v1925
    %2252 = vmatpush2.bf16.msra.mxu0 %v1924
    %2253 = vmatprep.subr.bf16.mxu0 %v1921
    %2254 = vmatpush2.bf16.msra.mxu0 %v1920
    %2255 = vmatprep.subr.bf16.mxu0 %v1917
    %2256 = vmatpush2.bf16.msra.mxu0 %v1916
    %2257 = vmatprep.subr.bf16.mxu0 %v1913
    %2258 = vmatpush2.bf16.msra.mxu0 %v1912
    %2259 = vmatprep.subr.bf16.mxu0 %v1909
    %2260 = vmatpush2.bf16.msra.mxu0 %v1908
    %2261 = vmatprep.subr.bf16.mxu0 %v1905
    %2262 = vmatpush2.bf16.msra.mxu0 %v1904
    %2263 = vmatprep.subr.bf16.mxu0 %v1901
    %2264 = vmatpush2.bf16.msra.mxu0 %v1900
    %2265 = vmatprep.subr.bf16.mxu0 %v1897
    %2266 = vmatpush2.bf16.msra.mxu0 %v1896
    %2267 = vmatprep.mubr.bf16.mxu0 %v1992
    %2268 = vmatmul.mubr.bf16.gmra.mxu0 %v1991
    %v2269 = vpop.f32.mrf.mxu0
    %v2270 = vadd.f32 %v2219, %v2269
    %v2271 = vpop.f32.mrf.mxu0
    %v2272 = vadd.f32 %v2221, %v2271
    %v2273 = vpop.f32.mrf.mxu0
    %v2274 = vadd.f32 %v2223, %v2273
    %v2275 = vpop.f32.mrf.mxu0
    %v2276 = vadd.f32 %v2225, %v2275
    %2277 = vmatprep.mubr.bf16.mxu0 %v1998
    %2278 = vmatmul.mubr.bf16.gmra.mxu0 %v1997
    %v2279 = vpop.f32.mrf.mxu0
    %v2280 = vadd.f32 %v2229, %v2279
    %v2281 = vpop.f32.mrf.mxu0
    %v2282 = vadd.f32 %v2231, %v2281
    %v2283 = vpop.f32.mrf.mxu0
    %v2284 = vpop.f32.mrf.mxu0
    %2285 = vdwg.mxu0
    %2286 = vmatprep.subr.bf16.mxu0 %v1957
    %2287 = vmatpush1.bf16.msra.mxu0 %v1956
    %2288 = vmatprep.subr.bf16.mxu0 %v1953
    %2289 = vmatpush1.bf16.msra.mxu0 %v1952
    %2290 = vmatprep.subr.bf16.mxu0 %v1949
    %2291 = vmatpush1.bf16.msra.mxu0 %v1948
    %2292 = vmatprep.subr.bf16.mxu0 %v1945
    %2293 = vmatpush1.bf16.msra.mxu0 %v1944
    %2294 = vmatprep.subr.bf16.mxu0 %v1941
    %2295 = vmatpush1.bf16.msra.mxu0 %v1940
    %2296 = vmatprep.subr.bf16.mxu0 %v1937
    %2297 = vmatpush1.bf16.msra.mxu0 %v1936
    %2298 = vmatprep.subr.bf16.mxu0 %v1933
    %2299 = vmatpush1.bf16.msra.mxu0 %v1932
    %2300 = vmatprep.subr.bf16.mxu0 %v1929
    %2301 = vmatpush1.bf16.msra.mxu0 %v1928
    %2302 = vmatprep.subr.bf16.mxu0 0
    %2303 = vmatpush2.bf16.msra.mxu0 0
    %2304 = vmatprep.subr.bf16.mxu0 0
    %2305 = vmatpush2.bf16.msra.mxu0 0
    %2306 = vmatprep.subr.bf16.mxu0 0
    %2307 = vmatpush2.bf16.msra.mxu0 0
    %2308 = vmatprep.subr.bf16.mxu0 0
    %2309 = vmatpush2.bf16.msra.mxu0 0
    %2310 = vmatprep.subr.bf16.mxu0 0
    %2311 = vmatpush2.bf16.msra.mxu0 0
    %2312 = vmatprep.subr.bf16.mxu0 0
    %2313 = vmatpush2.bf16.msra.mxu0 0
    %2314 = vmatprep.subr.bf16.mxu0 0
    %2315 = vmatpush2.bf16.msra.mxu0 0
    %2316 = vmatprep.subr.bf16.mxu0 %v2029
    %2317 = vmatpush2.bf16.msra.mxu0 %v2026
    %2318 = vmatprep.mubr.bf16.mxu0 %v2013
    %2319 = vmatmul.mubr.bf16.gmra.mxu0 %v1993
    %v2320 = vpop.f32.mrf.mxu0
    %v2321 = vadd.f32 %v2270, %v2320
    %v2322 = vpop.f32.mrf.mxu0
    %v2323 = vadd.f32 %v2272, %v2322
    %v2324 = vpop.f32.mrf.mxu0
    %v2325 = vadd.f32 %v2274, %v2324
    %v2326 = vpop.f32.mrf.mxu0
    %v2327 = vadd.f32 %v2276, %v2326
    %2328 = vmatprep.mubr.bf16.mxu0 %v2016
    %2329 = vmatmul.mubr.bf16.gmra.mxu0 %v1999
    %v2330 = vpop.f32.mrf.mxu0
    %v2331 = vadd.f32 %v2280, %v2330
    %v2332 = vpop.f32.mrf.mxu0
    %v2333 = vadd.f32 %v2282, %v2332
    %v2334 = vpop.f32.mrf.mxu0
    %v2335 = vpop.f32.mrf.mxu0
    %2336 = vdwg.mxu0
    %v2339 = vcombine.high %v28, %v28
    %v2340 = vcombine.high %v29, %v29
    %v2355 = vrot.slane %v2168, 4
    %v2356 = vrot.slane %v2170, 4
    %v2357 = vrot.slane %v2321, 4
    %v2358 = vrot.slane %v2323, 4
    %v2359 = vrot.slane %v2172, 4
    %v2360 = vsel %vm2018, %v2355, %v2359
    %v2361 = vrot.slane %v2174, 4
    %v2362 = vsel %vm2018, %v2356, %v2361
    %v2363 = vrot.slane %v2325, 4
    %v2364 = vsel %vm2018, %v2357, %v2363
    %v2365 = vrot.slane %v2327, 4
    %v2366 = vsel %vm2018, %v2358, %v2365
    %v2367 = vrot.slane %v2178, 4
    %v2368 = vsel %vm2018, %v2359, %v2367
    %v2369 = vrot.slane %v2180, 4
    %v2370 = vsel %vm2018, %v2361, %v2369
    %v2371 = vrot.slane %v2331, 4
    %v2372 = vsel %vm2018, %v2363, %v2371
    %v2373 = vrot.slane %v2333, 4
    %v2374 = vsel %vm2018, %v2365, %v2373
    %v2391 = vsel %vm2018, %v28, %v2355
    %v2392 = vsel %vm2018, %v2339, %v2356
    %v2393 = vsel %vm2018, %v29, %v2357
    %v2394 = vsel %vm2018, %v2340, %v2358
    %2395 = vst [vmem:[#allocation2] sm:$0xff] %v2391
    %2396 = vst [vmem:[#allocation2 + $0x8] sm:$0xff] %v2392
    %2397 = vst [vmem:[#allocation2 + $0x10] sm:$0xff] %v2393
    %2398 = vst [vmem:[#allocation2 + $0x18] sm:$0xff] %v2394
    %2399 = vst [vmem:[#allocation2 + $0x20] sm:$0xff] %v2360
    %2400 = vst [vmem:[#allocation2 + $0x28] sm:$0xff] %v2362
    %2401 = vst [vmem:[#allocation2 + $0x30] sm:$0xff] %v2364
    %2402 = vst [vmem:[#allocation2 + $0x38] sm:$0xff] %v2366
    %2403 = vst [vmem:[#allocation2 + $0x40] sm:$0xff] %v2368
    %2404 = vst [vmem:[#allocation2 + $0x48] sm:$0xff] %v2370
    %2405 = vst [vmem:[#allocation2 + $0x50] sm:$0xff] %v2372
    %2406 = vst [vmem:[#allocation2 + $0x58] sm:$0xff] %v2374
    %2407 = vst [vmem:[#allocation2 + $0x60] sm:$0xf] %v2367
    %2408 = vst [vmem:[#allocation2 + $0x68] sm:$0xf] %v2369
    %2409 = vst [vmem:[#allocation2 + $0x70] sm:$0xf] %v2371
    %2410 = vst [vmem:[#allocation2 + $0x78] sm:$0xf] %v2373
    // Predicated region
    $region30: #{tpu_custom_call.1} parent=1 // pred_check
      _
    $region31: #{tpu_custom_call.1} parent=1 // pred_check_branch
      %2412 = sbr.rel (0) target = $region33
    $region32: #{tpu_custom_call.1} parent=1 // pred_region
      %s2414 = ssub.s32 2048, 2048
      %2415 = vsyncadd [#allocation3], %s2414
      %s2416 = sshll.u32 [#allocation2], 4
      %s2417 = int_to_ptr.vmem [resolvable:$true] %s2416
      %2422 = dma.vmem_to_hbm [thread:$0]  %s2417, 2048, %s7, [#allocation3], 512, 512, 32
    $region33: #{tpu_custom_call.1} parent=1 // pred_fallthru
      _
    // Predicated region
    $region34: #{tpu_custom_call.1} parent=1 // pred_check
      _
    $region35: #{tpu_custom_call.1} parent=1 // pred_check_branch
      %2424 = sbr.rel (0) target = $region37
    $region36: #{tpu_custom_call.1} parent=1 // pred_region
      %2425 = dma.done [#allocation3], 2048
    $region37: #{tpu_custom_call.1} parent=1 // pred_fallthru
      _
    %2426 = vsyncpa [#allocation3], 1

</llo_original>
